<compile_context>
chip_gen: v7x
topology: tpu7x:2x2x1
jax: 0.10.0
libtpu: 0.0.40
codegen_flags: <defaults>
</compile_context>

<pallas_src>
import functools

import jax
import jax.numpy as jnp
import numpy as np
from jax.experimental import pallas as pl
from jax.experimental.pallas import tpu as pltpu

BN_EPS = 1e-5


def _toeplitz_weights(w_hwio, W):
    """Fold HWIO (3,3,Cin,Cout) conv weights into 3 block-banded matrices.

    T[ky] has shape (W*Cin, W*Cout) with
        T[ky][w_in*Cin + ci, w_out*Cout + co] = w[ky, w_in - w_out + 1, ci, co]
    so that (padded row at height h+ky-1) @ T[ky], summed over ky, is the
    'SAME'-padded 3x3 cross-correlation (the horizontal zero padding is implicit).
    """
    _, _, Cin, Cout = w_hwio.shape
    ts = []
    for ky in range(3):
        t = jnp.zeros((W, Cin, W, Cout), w_hwio.dtype)
        for kx in range(3):
            wo = np.arange(max(0, 1 - kx), min(W, W + 1 - kx))
            wi = wo + (kx - 1)
            t = t.at[wi, :, wo, :].set(w_hwio[ky, kx])
        ts.append(t.reshape(W * Cin, W * Cout))
    return jnp.stack(ts)


def _decoder_block_kernel(x_ref, fold_ref, unfold_ref,
                          t1_ref, bias1_ref, g1_ref, beta1_ref, a1_ref,
                          t2_ref, bias2_ref, g2_ref, beta2_ref, a2_ref,
                          t3_ref, bias3_ref, g3_ref, beta3_ref, a3_ref,
                          out_ref, xpad_ref, apad_ref,
                          *, N, H, W, Cin, Cout):
    WCo = W * Cout
    inv_cnt = 1.0 / float(N * H * W)

    def conv_bn_prelu(pad_ref, wck, t_ref, bias_ref, gamma_ref, beta_ref, alpha_ref):
        # 3x3 conv as 3 vertical taps; each tap is one lane-dense MXU matmul against
        # the block-banded weight matrix (horizontal taps + width padding folded in).
        acc = jnp.zeros((N * H, WCo), jnp.float32)
        for ky in range(3):
            slab = pad_ref[:, ky:ky + H, :].reshape(N * H, wck).astype(jnp.bfloat16)
            acc = acc + jnp.dot(slab, t_ref[ky],
                                preferred_element_type=jnp.float32)
        acc = acc + bias_ref[...]          # conv bias (mathematically cancelled by BN)

        # BatchNorm2d, training mode: single-pass batch stats over N*H*W,
        # biased variance, eps=1e-5.  Lane->channel fold via a constant matmul.
        s = jnp.concatenate([jnp.sum(acc, axis=0, keepdims=True),
                             jnp.sum(acc * acc, axis=0, keepdims=True)], axis=0)
        sc = jnp.dot(s, fold_ref[...], preferred_element_type=jnp.float32)   # (2, Cout)
        mean = sc[0:1] * inv_cnt
        var = sc[1:2] * inv_cnt - mean * mean
        scale = gamma_ref[...] * jax.lax.rsqrt(var + BN_EPS)                 # (1, Cout)
        shift = beta_ref[...] - mean * scale
        st = jnp.dot(jnp.concatenate([scale, shift], axis=0), unfold_ref[...],
                     preferred_element_type=jnp.float32)                     # (2, W*Cout)
        y = acc * st[0:1] + st[1:2]
        # PReLU with per-channel slope (slopes pre-tiled to the lane layout).
        return jnp.where(y >= 0.0, y, alpha_ref[...] * y)                    # (N*H, W*Cout)

    # Stage-1 padded input built in VMEM (no jnp.pad / extra HBM round trip).
    xpad_ref[...] = jnp.zeros(xpad_ref.shape, xpad_ref.dtype)
    xpad_ref[:, 1:H + 1, :] = x_ref[...]
    apad_ref[...] = jnp.zeros(apad_ref.shape, apad_ref.dtype)

    y = conv_bn_prelu(xpad_ref, W * Cin, t1_ref, bias1_ref, g1_ref, beta1_ref, a1_ref)
    apad_ref[:, 1:H + 1, :] = y.reshape(N, H, WCo)
    y = conv_bn_prelu(apad_ref, WCo, t2_ref, bias2_ref, g2_ref, beta2_ref, a2_ref)
    apad_ref[:, 1:H + 1, :] = y.reshape(N, H, WCo)
    y = conv_bn_prelu(apad_ref, WCo, t3_ref, bias3_ref, g3_ref, beta3_ref, a3_ref)
    out_ref[...] = y.reshape(N, H, WCo)      # lane-dense (last dim 128) unmasked stores


def decoder_block_prelu(x_nhwc, params):
    """DecoderBlockPrelu.forward.  x_nhwc: (N, H, W, Cin); params: 3 tuples of
    (w_hwio(3,3,cin,cout), bias(cout,), bn_gamma, bn_beta, prelu_alpha)."""
    N, H, W, Cin = x_nhwc.shape
    Cout = params[0][0].shape[-1]
    WCo = W * Cout

    # Constant lane<->channel fold matrices: lane i of a (.., W*Cout) row holds
    # channel i % Cout.
    fold_np = np.zeros((WCo, Cout), np.float32)
    fold_np[np.arange(WCo), np.arange(WCo) % Cout] = 1.0
    fold = jnp.asarray(fold_np)            # (W*Cout, Cout)
    unfold = jnp.asarray(fold_np.T)        # (Cout, W*Cout)

    args = [x_nhwc.reshape(N, H, W * Cin), fold, unfold]
    for (w, b, gamma, beta, alpha) in params:
        args += [
            _toeplitz_weights(w, W).astype(jnp.bfloat16),      # (3, W*cin, W*Cout) bf16
            jnp.tile(jnp.reshape(b, (1, Cout)), (1, W)),       # bias tiled to lanes
            jnp.reshape(gamma, (1, Cout)),
            jnp.reshape(beta, (1, Cout)),
            jnp.tile(jnp.reshape(alpha, (1, Cout)), (1, W)),   # PReLU slope tiled to lanes
        ]

    vmem = pltpu.MemorySpace.VMEM
    kernel = functools.partial(_decoder_block_kernel,
                               N=N, H=H, W=W, Cin=Cin, Cout=Cout)
    out = pl.pallas_call(
        kernel,
        out_shape=jax.ShapeDtypeStruct((N, H, WCo), jnp.float32),
        in_specs=[pl.BlockSpec(memory_space=vmem)] * len(args),
        out_specs=pl.BlockSpec(memory_space=vmem),
        scratch_shapes=[pltpu.VMEM((N, H + 2, W * Cin), jnp.float32),   # padded stage-1 input
                        pltpu.VMEM((N, H + 2, WCo), jnp.float32)],      # padded intermediates
        compiler_params=pltpu.CompilerParams(vmem_limit_bytes=32 * 1024 * 1024),
    )(*args)
    return out.reshape(N, H, W, Cout)


# ---------------- pure-JAX reference (for correctness check) ----------------
def _ref_conv_bn_prelu(x, w, b, gamma, beta, alpha):
    y = jax.lax.conv_general_dilated(
        x, w, window_strides=(1, 1), padding='SAME',
        dimension_numbers=('NHWC', 'HWIO', 'NHWC')) + b
    mean = y.mean(axis=(0, 1, 2))
    var = ((y - mean) ** 2).mean(axis=(0, 1, 2))
    y = gamma * (y - mean) * jax.lax.rsqrt(var + BN_EPS) + beta
    return jnp.where(y >= 0.0, y, alpha * y)


def _ref_decoder_block(x, params):
    y = x
    for (w, b, gamma, beta, alpha) in params:
        y = _ref_conv_bn_prelu(y, w, b, gamma, beta, alpha)
    return y


if __name__ == "__main__":
    key = jax.random.PRNGKey(0)

    # Small shapes consistent with DecoderBlockPrelu(in_channels=4, out_channels=8).
    N, Cin, H, W = 2, 4, 16, 16
    Cout = 8

    key, kx = jax.random.split(key)
    x_nchw = jax.random.normal(kx, (N, Cin, H, W), jnp.float32)   # PyTorch layout
    x_nhwc = jnp.transpose(x_nchw, (0, 2, 3, 1))                  # kernel layout

    # Deterministic parameter init (PyTorch-style uniform bounds), HWIO weights.
    params = []
    c_in = Cin
    for _ in range(3):
        key, kw, kb, ka = jax.random.split(key, 4)
        fan_in = c_in * 3 * 3
        bound = 1.0 / np.sqrt(fan_in)
        w = jax.random.uniform(kw, (3, 3, c_in, Cout), jnp.float32,
                               minval=-bound, maxval=bound)
        b = jax.random.uniform(kb, (Cout,), jnp.float32,
                               minval=-bound, maxval=bound)
        gamma = jnp.ones((Cout,), jnp.float32)   # BatchNorm weight init
        beta = jnp.zeros((Cout,), jnp.float32)   # BatchNorm bias init
        # Module init is PReLU(init=0) (== ReLU); use small nonzero per-channel
        # slopes here so the PReLU path is actually exercised by the check.
        alpha = jax.random.uniform(ka, (Cout,), jnp.float32, minval=0.0, maxval=0.25)
        params.append((w, b, gamma, beta, alpha))
        c_in = Cout

    run = jax.jit(decoder_block_prelu)
    out = jax.block_until_ready(run(x_nhwc, params))

    ref = jax.block_until_ready(_ref_decoder_block(x_nhwc, params))
    # bf16 MXU inputs through three conv+BN stages: atol also absorbs sign flips of
    # near-zero pre-activations at the PReLU kink (outputs are ~unit scale after BN).
    np.testing.assert_allclose(np.asarray(out), np.asarray(ref),
                               rtol=5e-2, atol=5e-2)

    print("KERNEL_OK")
</pallas_src>

<mosaic_0001>
module attributes {stable_mosaic.version = 11 : i64} {
  func.func @_decoder_block_kernel(%arg0: memref<2x16x64xf32, #tpu.memory_space<vmem>>, %arg1: memref<128x8xf32, #tpu.memory_space<vmem>>, %arg2: memref<8x128xf32, #tpu.memory_space<vmem>>, %arg3: memref<3x64x128xbf16, #tpu.memory_space<vmem>>, %arg4: memref<1x128xf32, #tpu.memory_space<vmem>>, %arg5: memref<1x8xf32, #tpu.memory_space<vmem>>, %arg6: memref<1x8xf32, #tpu.memory_space<vmem>>, %arg7: memref<1x128xf32, #tpu.memory_space<vmem>>, %arg8: memref<3x128x128xbf16, #tpu.memory_space<vmem>>, %arg9: memref<1x128xf32, #tpu.memory_space<vmem>>, %arg10: memref<1x8xf32, #tpu.memory_space<vmem>>, %arg11: memref<1x8xf32, #tpu.memory_space<vmem>>, %arg12: memref<1x128xf32, #tpu.memory_space<vmem>>, %arg13: memref<3x128x128xbf16, #tpu.memory_space<vmem>>, %arg14: memref<1x128xf32, #tpu.memory_space<vmem>>, %arg15: memref<1x8xf32, #tpu.memory_space<vmem>>, %arg16: memref<1x8xf32, #tpu.memory_space<vmem>>, %arg17: memref<1x128xf32, #tpu.memory_space<vmem>>, %arg18: memref<2x16x128xf32, #tpu.memory_space<vmem>>, %arg19: memref<2x18x64xf32, #tpu.memory_space<vmem>>, %arg20: memref<2x18x128xf32, #tpu.memory_space<vmem>>) attributes {dimension_semantics = [], scalar_prefetch = 0 : i64, scratch_operands = 2 : i64, tpu.core_type = #tpu.core_type<tc>} {
    %cst = arith.constant 0.000000e+00 : f32
    %0 = vector.broadcast %cst : f32 to vector<2x18x64xf32>
    %c0 = arith.constant 0 : index
    %c0_0 = arith.constant 0 : index
    %c0_1 = arith.constant 0 : index
    %1 = vector.load %arg19[%c0, %c0_0, %c0_1] : memref<2x18x64xf32, #tpu.memory_space<vmem>>, vector<2x18x64xf32>
    tpu.vector_store %arg19[%c0, %c0_0, %c0_1], %0 {strides = array<i32>} : memref<2x18x64xf32, #tpu.memory_space<vmem>>, vector<2x18x64xf32>,
    %c0_2 = arith.constant 0 : index
    %c0_3 = arith.constant 0 : index
    %c0_4 = arith.constant 0 : index
    %2 = vector.load %arg0[%c0_2, %c0_3, %c0_4] : memref<2x16x64xf32, #tpu.memory_space<vmem>>, vector<2x16x64xf32>
    %c0_5 = arith.constant 0 : index
    %c1 = arith.constant 1 : index
    %c0_6 = arith.constant 0 : index
    %3 = vector.load %arg19[%c0_5, %c1, %c0_6] : memref<2x18x64xf32, #tpu.memory_space<vmem>>, vector<2x16x64xf32>
    tpu.vector_store %arg19[%c0_5, %c1, %c0_6], %2 {strides = array<i32>} : memref<2x18x64xf32, #tpu.memory_space<vmem>>, vector<2x16x64xf32>,
    %cst_7 = arith.constant 0.000000e+00 : f32
    %4 = vector.broadcast %cst_7 : f32 to vector<2x18x128xf32>
    %c0_8 = arith.constant 0 : index
    %c0_9 = arith.constant 0 : index
    %c0_10 = arith.constant 0 : index
    %5 = vector.load %arg20[%c0_8, %c0_9, %c0_10] : memref<2x18x128xf32, #tpu.memory_space<vmem>>, vector<2x18x128xf32>
    tpu.vector_store %arg20[%c0_8, %c0_9, %c0_10], %4 {strides = array<i32>} : memref<2x18x128xf32, #tpu.memory_space<vmem>>, vector<2x18x128xf32>,
    %cst_11 = arith.constant 0.000000e+00 : f32
    %6 = vector.broadcast %cst_11 : f32 to vector<32x128xf32>
    %c0_12 = arith.constant 0 : index
    %c0_13 = arith.constant 0 : index
    %c0_14 = arith.constant 0 : index
    %7 = vector.load %arg19[%c0_12, %c0_13, %c0_14] : memref<2x18x64xf32, #tpu.memory_space<vmem>>, vector<2x16x64xf32>
    %8 = vector.shape_cast %7 : vector<2x16x64xf32> to vector<32x64xf32>
    %9 = arith.truncf %8 : vector<32x64xf32> to vector<32x64xbf16>
    %c0_15 = arith.constant 0 : index
    %c0_16 = arith.constant 0 : index
    %c0_17 = arith.constant 0 : index
    %10 = vector.load %arg3[%c0_15, %c0_16, %c0_17] : memref<3x64x128xbf16, #tpu.memory_space<vmem>>, vector<1x64x128xbf16>
    %11 = vector.shape_cast %10 : vector<1x64x128xbf16> to vector<64x128xbf16>
    %cst_18 = arith.constant dense<0.000000e+00> : vector<32x128xf32>
    %12 = tpu.matmul %9, %11, %cst_18 {dimension_numbers = #tpu.dot_dimension_numbers<[1], [0], [0], [1], [0, 0, 1, 1], [], []>} : vector<32x64xbf16>, vector<64x128xbf16>, vector<32x128xf32> -> vector<32x128xf32>
    %13 = arith.addf %6, %12 : vector<32x128xf32>
    %c0_19 = arith.constant 0 : index
    %c1_20 = arith.constant 1 : index
    %c0_21 = arith.constant 0 : index
    %14 = vector.load %arg19[%c0_19, %c1_20, %c0_21] : memref<2x18x64xf32, #tpu.memory_space<vmem>>, vector<2x16x64xf32>
    %15 = vector.shape_cast %14 : vector<2x16x64xf32> to vector<32x64xf32>
    %16 = arith.truncf %15 : vector<32x64xf32> to vector<32x64xbf16>
    %c1_22 = arith.constant 1 : index
    %c0_23 = arith.constant 0 : index
    %c0_24 = arith.constant 0 : index
    %17 = vector.load %arg3[%c1_22, %c0_23, %c0_24] : memref<3x64x128xbf16, #tpu.memory_space<vmem>>, vector<1x64x128xbf16>
    %18 = vector.shape_cast %17 : vector<1x64x128xbf16> to vector<64x128xbf16>
    %cst_25 = arith.constant dense<0.000000e+00> : vector<32x128xf32>
    %19 = tpu.matmul %16, %18, %cst_25 {dimension_numbers = #tpu.dot_dimension_numbers<[1], [0], [0], [1], [0, 0, 1, 1], [], []>} : vector<32x64xbf16>, vector<64x128xbf16>, vector<32x128xf32> -> vector<32x128xf32>
    %20 = arith.addf %13, %19 : vector<32x128xf32>
    %c0_26 = arith.constant 0 : index
    %c2 = arith.constant 2 : index
    %c0_27 = arith.constant 0 : index
    %21 = vector.load %arg19[%c0_26, %c2, %c0_27] : memref<2x18x64xf32, #tpu.memory_space<vmem>>, vector<2x16x64xf32>
    %22 = vector.shape_cast %21 : vector<2x16x64xf32> to vector<32x64xf32>
    %23 = arith.truncf %22 : vector<32x64xf32> to vector<32x64xbf16>
    %c2_28 = arith.constant 2 : index
    %c0_29 = arith.constant 0 : index
    %c0_30 = arith.constant 0 : index
    %24 = vector.load %arg3[%c2_28, %c0_29, %c0_30] : memref<3x64x128xbf16, #tpu.memory_space<vmem>>, vector<1x64x128xbf16>
    %25 = vector.shape_cast %24 : vector<1x64x128xbf16> to vector<64x128xbf16>
    %cst_31 = arith.constant dense<0.000000e+00> : vector<32x128xf32>
    %26 = tpu.matmul %23, %25, %cst_31 {dimension_numbers = #tpu.dot_dimension_numbers<[1], [0], [0], [1], [0, 0, 1, 1], [], []>} : vector<32x64xbf16>, vector<64x128xbf16>, vector<32x128xf32> -> vector<32x128xf32>
    %27 = arith.addf %20, %26 : vector<32x128xf32>
    %c0_32 = arith.constant 0 : index
    %c0_33 = arith.constant 0 : index
    %28 = vector.load %arg4[%c0_32, %c0_33] : memref<1x128xf32, #tpu.memory_space<vmem>>, vector<1x128xf32>
    %29 = vector.broadcast %28 : vector<1x128xf32> to vector<32x128xf32>
    %30 = arith.addf %27, %29 : vector<32x128xf32>
    %cst_34 = arith.constant dense<0.000000e+00> : vector<128xf32>
    %31 = vector.multi_reduction <add>, %30, %cst_34 [0] : vector<32x128xf32> to vector<128xf32>
    %32 = vector.shape_cast %31 : vector<128xf32> to vector<1x128xf32>
    %33 = arith.mulf %30, %30 : vector<32x128xf32>
    %cst_35 = arith.constant dense<0.000000e+00> : vector<128xf32>
    %34 = vector.multi_reduction <add>, %33, %cst_35 [0] : vector<32x128xf32> to vector<128xf32>
    %35 = vector.shape_cast %34 : vector<128xf32> to vector<1x128xf32>
    %36 = tpu.concatenate %32, %35 in 0 : vector<1x128xf32>, vector<1x128xf32> -> vector<2x128xf32>
    %c0_36 = arith.constant 0 : index
    %c0_37 = arith.constant 0 : index
    %37 = vector.load %arg1[%c0_36, %c0_37] : memref<128x8xf32, #tpu.memory_space<vmem>>, vector<128x8xf32>
    %cst_38 = arith.constant dense<0.000000e+00> : vector<2x8xf32>
    %38 = tpu.matmul %36, %37, %cst_38 {dimension_numbers = #tpu.dot_dimension_numbers<[1], [0], [0], [1], [0, 0, 1, 1], [], []>} : vector<2x128xf32>, vector<128x8xf32>, vector<2x8xf32> -> vector<2x8xf32>
    %39 = vector.extract_strided_slice %38 {offsets = [0, 0], sizes = [1, 8], strides = [1, 1]} : vector<2x8xf32> to vector<1x8xf32>
    %cst_39 = arith.constant 0.001953125 : f32
    %40 = vector.broadcast %cst_39 : f32 to vector<1x8xf32>
    %41 = arith.mulf %39, %40 : vector<1x8xf32>
    %42 = vector.extract_strided_slice %38 {offsets = [1, 0], sizes = [1, 8], strides = [1, 1]} : vector<2x8xf32> to vector<1x8xf32>
    %cst_40 = arith.constant 0.001953125 : f32
    %43 = vector.broadcast %cst_40 : f32 to vector<1x8xf32>
    %44 = arith.mulf %42, %43 : vector<1x8xf32>
    %45 = arith.mulf %41, %41 : vector<1x8xf32>
    %46 = arith.subf %44, %45 : vector<1x8xf32>
    %c0_41 = arith.constant 0 : index
    %c0_42 = arith.constant 0 : index
    %47 = vector.load %arg5[%c0_41, %c0_42] : memref<1x8xf32, #tpu.memory_space<vmem>>, vector<1x8xf32>
    %cst_43 = arith.constant 9.99999974E-6 : f32
    %48 = vector.broadcast %cst_43 : f32 to vector<1x8xf32>
    %49 = arith.addf %46, %48 : vector<1x8xf32>
    %50 = math.rsqrt %49 : vector<1x8xf32>
    %51 = arith.mulf %47, %50 : vector<1x8xf32>
    %c0_44 = arith.constant 0 : index
    %c0_45 = arith.constant 0 : index
    %52 = vector.load %arg6[%c0_44, %c0_45] : memref<1x8xf32, #tpu.memory_space<vmem>>, vector<1x8xf32>
    %53 = arith.mulf %41, %51 : vector<1x8xf32>
    %54 = arith.subf %52, %53 : vector<1x8xf32>
    %55 = tpu.concatenate %51, %54 in 0 : vector<1x8xf32>, vector<1x8xf32> -> vector<2x8xf32>
    %c0_46 = arith.constant 0 : index
    %c0_47 = arith.constant 0 : index
    %56 = vector.load %arg2[%c0_46, %c0_47] : memref<8x128xf32, #tpu.memory_space<vmem>>, vector<8x128xf32>
    %cst_48 = arith.constant dense<0.000000e+00> : vector<2x128xf32>
    %57 = tpu.matmul %55, %56, %cst_48 {dimension_numbers = #tpu.dot_dimension_numbers<[1], [0], [0], [1], [0, 0, 1, 1], [], []>} : vector<2x8xf32>, vector<8x128xf32>, vector<2x128xf32> -> vector<2x128xf32>
    %58 = vector.extract_strided_slice %57 {offsets = [0, 0], sizes = [1, 128], strides = [1, 1]} : vector<2x128xf32> to vector<1x128xf32>
    %59 = vector.broadcast %58 : vector<1x128xf32> to vector<32x128xf32>
    %60 = arith.mulf %30, %59 : vector<32x128xf32>
    %61 = vector.extract_strided_slice %57 {offsets = [1, 0], sizes = [1, 128], strides = [1, 1]} : vector<2x128xf32> to vector<1x128xf32>
    %62 = vector.broadcast %61 : vector<1x128xf32> to vector<32x128xf32>
    %63 = arith.addf %60, %62 : vector<32x128xf32>
    %cst_49 = arith.constant 0.000000e+00 : f32
    %64 = vector.broadcast %cst_49 : f32 to vector<32x128xf32>
    %65 = arith.cmpf oge, %63, %64 : vector<32x128xf32>
    %c0_50 = arith.constant 0 : index
    %c0_51 = arith.constant 0 : index
    %66 = vector.load %arg7[%c0_50, %c0_51] : memref<1x128xf32, #tpu.memory_space<vmem>>, vector<1x128xf32>
    %67 = vector.broadcast %66 : vector<1x128xf32> to vector<32x128xf32>
    %68 = arith.mulf %67, %63 : vector<32x128xf32>
    %69 = arith.select %65, %63, %68 : vector<32x128xi1>, vector<32x128xf32>
    %70 = vector.shape_cast %69 : vector<32x128xf32> to vector<2x16x128xf32>
    %c0_52 = arith.constant 0 : index
    %c1_53 = arith.constant 1 : index
    %c0_54 = arith.constant 0 : index
    %71 = vector.load %arg20[%c0_52, %c1_53, %c0_54] : memref<2x18x128xf32, #tpu.memory_space<vmem>>, vector<2x16x128xf32>
    tpu.vector_store %arg20[%c0_52, %c1_53, %c0_54], %70 {strides = array<i32>} : memref<2x18x128xf32, #tpu.memory_space<vmem>>, vector<2x16x128xf32>,
    %cst_55 = arith.constant 0.000000e+00 : f32
    %72 = vector.broadcast %cst_55 : f32 to vector<32x128xf32>
    %c0_56 = arith.constant 0 : index
    %c0_57 = arith.constant 0 : index
    %c0_58 = arith.constant 0 : index
    %73 = vector.load %arg20[%c0_56, %c0_57, %c0_58] : memref<2x18x128xf32, #tpu.memory_space<vmem>>, vector<2x16x128xf32>
    %74 = vector.shape_cast %73 : vector<2x16x128xf32> to vector<32x128xf32>
    %75 = arith.truncf %74 : vector<32x128xf32> to vector<32x128xbf16>
    %c0_59 = arith.constant 0 : index
    %c0_60 = arith.constant 0 : index
    %c0_61 = arith.constant 0 : index
    %76 = vector.load %arg8[%c0_59, %c0_60, %c0_61] : memref<3x128x128xbf16, #tpu.memory_space<vmem>>, vector<1x128x128xbf16>
    %77 = vector.shape_cast %76 : vector<1x128x128xbf16> to vector<128x128xbf16>
    %cst_62 = arith.constant dense<0.000000e+00> : vector<32x128xf32>
    %78 = tpu.matmul %75, %77, %cst_62 {dimension_numbers = #tpu.dot_dimension_numbers<[1], [0], [0], [1], [0, 0, 1, 1], [], []>} : vector<32x128xbf16>, vector<128x128xbf16>, vector<32x128xf32> -> vector<32x128xf32>
    %79 = arith.addf %72, %78 : vector<32x128xf32>
    %c0_63 = arith.constant 0 : index
    %c1_64 = arith.constant 1 : index
    %c0_65 = arith.constant 0 : index
    %80 = vector.load %arg20[%c0_63, %c1_64, %c0_65] : memref<2x18x128xf32, #tpu.memory_space<vmem>>, vector<2x16x128xf32>
    %81 = vector.shape_cast %80 : vector<2x16x128xf32> to vector<32x128xf32>
    %82 = arith.truncf %81 : vector<32x128xf32> to vector<32x128xbf16>
    %c1_66 = arith.constant 1 : index
    %c0_67 = arith.constant 0 : index
    %c0_68 = arith.constant 0 : index
    %83 = vector.load %arg8[%c1_66, %c0_67, %c0_68] : memref<3x128x128xbf16, #tpu.memory_space<vmem>>, vector<1x128x128xbf16>
    %84 = vector.shape_cast %83 : vector<1x128x128xbf16> to vector<128x128xbf16>
    %cst_69 = arith.constant dense<0.000000e+00> : vector<32x128xf32>
    %85 = tpu.matmul %82, %84, %cst_69 {dimension_numbers = #tpu.dot_dimension_numbers<[1], [0], [0], [1], [0, 0, 1, 1], [], []>} : vector<32x128xbf16>, vector<128x128xbf16>, vector<32x128xf32> -> vector<32x128xf32>
    %86 = arith.addf %79, %85 : vector<32x128xf32>
    %c0_70 = arith.constant 0 : index
    %c2_71 = arith.constant 2 : index
    %c0_72 = arith.constant 0 : index
    %87 = vector.load %arg20[%c0_70, %c2_71, %c0_72] : memref<2x18x128xf32, #tpu.memory_space<vmem>>, vector<2x16x128xf32>
    %88 = vector.shape_cast %87 : vector<2x16x128xf32> to vector<32x128xf32>
    %89 = arith.truncf %88 : vector<32x128xf32> to vector<32x128xbf16>
    %c2_73 = arith.constant 2 : index
    %c0_74 = arith.constant 0 : index
    %c0_75 = arith.constant 0 : index
    %90 = vector.load %arg8[%c2_73, %c0_74, %c0_75] : memref<3x128x128xbf16, #tpu.memory_space<vmem>>, vector<1x128x128xbf16>
    %91 = vector.shape_cast %90 : vector<1x128x128xbf16> to vector<128x128xbf16>
    %cst_76 = arith.constant dense<0.000000e+00> : vector<32x128xf32>
    %92 = tpu.matmul %89, %91, %cst_76 {dimension_numbers = #tpu.dot_dimension_numbers<[1], [0], [0], [1], [0, 0, 1, 1], [], []>} : vector<32x128xbf16>, vector<128x128xbf16>, vector<32x128xf32> -> vector<32x128xf32>
    %93 = arith.addf %86, %92 : vector<32x128xf32>
    %c0_77 = arith.constant 0 : index
    %c0_78 = arith.constant 0 : index
    %94 = vector.load %arg9[%c0_77, %c0_78] : memref<1x128xf32, #tpu.memory_space<vmem>>, vector<1x128xf32>
    %95 = vector.broadcast %94 : vector<1x128xf32> to vector<32x128xf32>
    %96 = arith.addf %93, %95 : vector<32x128xf32>
    %cst_79 = arith.constant dense<0.000000e+00> : vector<128xf32>
    %97 = vector.multi_reduction <add>, %96, %cst_79 [0] : vector<32x128xf32> to vector<128xf32>
    %98 = vector.shape_cast %97 : vector<128xf32> to vector<1x128xf32>
    %99 = arith.mulf %96, %96 : vector<32x128xf32>
    %cst_80 = arith.constant dense<0.000000e+00> : vector<128xf32>
    %100 = vector.multi_reduction <add>, %99, %cst_80 [0] : vector<32x128xf32> to vector<128xf32>
    %101 = vector.shape_cast %100 : vector<128xf32> to vector<1x128xf32>
    %102 = tpu.concatenate %98, %101 in 0 : vector<1x128xf32>, vector<1x128xf32> -> vector<2x128xf32>
    %c0_81 = arith.constant 0 : index
    %c0_82 = arith.constant 0 : index
    %103 = vector.load %arg1[%c0_81, %c0_82] : memref<128x8xf32, #tpu.memory_space<vmem>>, vector<128x8xf32>
    %cst_83 = arith.constant dense<0.000000e+00> : vector<2x8xf32>
    %104 = tpu.matmul %102, %103, %cst_83 {dimension_numbers = #tpu.dot_dimension_numbers<[1], [0], [0], [1], [0, 0, 1, 1], [], []>} : vector<2x128xf32>, vector<128x8xf32>, vector<2x8xf32> -> vector<2x8xf32>
    %105 = vector.extract_strided_slice %104 {offsets = [0, 0], sizes = [1, 8], strides = [1, 1]} : vector<2x8xf32> to vector<1x8xf32>
    %cst_84 = arith.constant 0.001953125 : f32
    %106 = vector.broadcast %cst_84 : f32 to vector<1x8xf32>
    %107 = arith.mulf %105, %106 : vector<1x8xf32>
    %108 = vector.extract_strided_slice %104 {offsets = [1, 0], sizes = [1, 8], strides = [1, 1]} : vector<2x8xf32> to vector<1x8xf32>
    %cst_85 = arith.constant 0.001953125 : f32
    %109 = vector.broadcast %cst_85 : f32 to vector<1x8xf32>
    %110 = arith.mulf %108, %109 : vector<1x8xf32>
    %111 = arith.mulf %107, %107 : vector<1x8xf32>
    %112 = arith.subf %110, %111 : vector<1x8xf32>
    %c0_86 = arith.constant 0 : index
    %c0_87 = arith.constant 0 : index
    %113 = vector.load %arg10[%c0_86, %c0_87] : memref<1x8xf32, #tpu.memory_space<vmem>>, vector<1x8xf32>
    %cst_88 = arith.constant 9.99999974E-6 : f32
    %114 = vector.broadcast %cst_88 : f32 to vector<1x8xf32>
    %115 = arith.addf %112, %114 : vector<1x8xf32>
    %116 = math.rsqrt %115 : vector<1x8xf32>
    %117 = arith.mulf %113, %116 : vector<1x8xf32>
    %c0_89 = arith.constant 0 : index
    %c0_90 = arith.constant 0 : index
    %118 = vector.load %arg11[%c0_89, %c0_90] : memref<1x8xf32, #tpu.memory_space<vmem>>, vector<1x8xf32>
    %119 = arith.mulf %107, %117 : vector<1x8xf32>
    %120 = arith.subf %118, %119 : vector<1x8xf32>
    %121 = tpu.concatenate %117, %120 in 0 : vector<1x8xf32>, vector<1x8xf32> -> vector<2x8xf32>
    %c0_91 = arith.constant 0 : index
    %c0_92 = arith.constant 0 : index
    %122 = vector.load %arg2[%c0_91, %c0_92] : memref<8x128xf32, #tpu.memory_space<vmem>>, vector<8x128xf32>
    %cst_93 = arith.constant dense<0.000000e+00> : vector<2x128xf32>
    %123 = tpu.matmul %121, %122, %cst_93 {dimension_numbers = #tpu.dot_dimension_numbers<[1], [0], [0], [1], [0, 0, 1, 1], [], []>} : vector<2x8xf32>, vector<8x128xf32>, vector<2x128xf32> -> vector<2x128xf32>
    %124 = vector.extract_strided_slice %123 {offsets = [0, 0], sizes = [1, 128], strides = [1, 1]} : vector<2x128xf32> to vector<1x128xf32>
    %125 = vector.broadcast %124 : vector<1x128xf32> to vector<32x128xf32>
    %126 = arith.mulf %96, %125 : vector<32x128xf32>
    %127 = vector.extract_strided_slice %123 {offsets = [1, 0], sizes = [1, 128], strides = [1, 1]} : vector<2x128xf32> to vector<1x128xf32>
    %128 = vector.broadcast %127 : vector<1x128xf32> to vector<32x128xf32>
    %129 = arith.addf %126, %128 : vector<32x128xf32>
    %cst_94 = arith.constant 0.000000e+00 : f32
    %130 = vector.broadcast %cst_94 : f32 to vector<32x128xf32>
    %131 = arith.cmpf oge, %129, %130 : vector<32x128xf32>
    %c0_95 = arith.constant 0 : index
    %c0_96 = arith.constant 0 : index
    %132 = vector.load %arg12[%c0_95, %c0_96] : memref<1x128xf32, #tpu.memory_space<vmem>>, vector<1x128xf32>
    %133 = vector.broadcast %132 : vector<1x128xf32> to vector<32x128xf32>
    %134 = arith.mulf %133, %129 : vector<32x128xf32>
    %135 = arith.select %131, %129, %134 : vector<32x128xi1>, vector<32x128xf32>
    %136 = vector.shape_cast %135 : vector<32x128xf32> to vector<2x16x128xf32>
    %c0_97 = arith.constant 0 : index
    %c1_98 = arith.constant 1 : index
    %c0_99 = arith.constant 0 : index
    %137 = vector.load %arg20[%c0_97, %c1_98, %c0_99] : memref<2x18x128xf32, #tpu.memory_space<vmem>>, vector<2x16x128xf32>
    tpu.vector_store %arg20[%c0_97, %c1_98, %c0_99], %136 {strides = array<i32>} : memref<2x18x128xf32, #tpu.memory_space<vmem>>, vector<2x16x128xf32>,
    %cst_100 = arith.constant 0.000000e+00 : f32
    %138 = vector.broadcast %cst_100 : f32 to vector<32x128xf32>
    %c0_101 = arith.constant 0 : index
    %c0_102 = arith.constant 0 : index
    %c0_103 = arith.constant 0 : index
    %139 = vector.load %arg20[%c0_101, %c0_102, %c0_103] : memref<2x18x128xf32, #tpu.memory_space<vmem>>, vector<2x16x128xf32>
    %140 = vector.shape_cast %139 : vector<2x16x128xf32> to vector<32x128xf32>
    %141 = arith.truncf %140 : vector<32x128xf32> to vector<32x128xbf16>
    %c0_104 = arith.constant 0 : index
    %c0_105 = arith.constant 0 : index
    %c0_106 = arith.constant 0 : index
    %142 = vector.load %arg13[%c0_104, %c0_105, %c0_106] : memref<3x128x128xbf16, #tpu.memory_space<vmem>>, vector<1x128x128xbf16>
    %143 = vector.shape_cast %142 : vector<1x128x128xbf16> to vector<128x128xbf16>
    %cst_107 = arith.constant dense<0.000000e+00> : vector<32x128xf32>
    %144 = tpu.matmul %141, %143, %cst_107 {dimension_numbers = #tpu.dot_dimension_numbers<[1], [0], [0], [1], [0, 0, 1, 1], [], []>} : vector<32x128xbf16>, vector<128x128xbf16>, vector<32x128xf32> -> vector<32x128xf32>
    %145 = arith.addf %138, %144 : vector<32x128xf32>
    %c0_108 = arith.constant 0 : index
    %c1_109 = arith.constant 1 : index
    %c0_110 = arith.constant 0 : index
    %146 = vector.load %arg20[%c0_108, %c1_109, %c0_110] : memref<2x18x128xf32, #tpu.memory_space<vmem>>, vector<2x16x128xf32>
    %147 = vector.shape_cast %146 : vector<2x16x128xf32> to vector<32x128xf32>
    %148 = arith.truncf %147 : vector<32x128xf32> to vector<32x128xbf16>
    %c1_111 = arith.constant 1 : index
    %c0_112 = arith.constant 0 : index
    %c0_113 = arith.constant 0 : index
    %149 = vector.load %arg13[%c1_111, %c0_112, %c0_113] : memref<3x128x128xbf16, #tpu.memory_space<vmem>>, vector<1x128x128xbf16>
    %150 = vector.shape_cast %149 : vector<1x128x128xbf16> to vector<128x128xbf16>
    %cst_114 = arith.constant dense<0.000000e+00> : vector<32x128xf32>
    %151 = tpu.matmul %148, %150, %cst_114 {dimension_numbers = #tpu.dot_dimension_numbers<[1], [0], [0], [1], [0, 0, 1, 1], [], []>} : vector<32x128xbf16>, vector<128x128xbf16>, vector<32x128xf32> -> vector<32x128xf32>
    %152 = arith.addf %145, %151 : vector<32x128xf32>
    %c0_115 = arith.constant 0 : index
    %c2_116 = arith.constant 2 : index
    %c0_117 = arith.constant 0 : index
    %153 = vector.load %arg20[%c0_115, %c2_116, %c0_117] : memref<2x18x128xf32, #tpu.memory_space<vmem>>, vector<2x16x128xf32>
    %154 = vector.shape_cast %153 : vector<2x16x128xf32> to vector<32x128xf32>
    %155 = arith.truncf %154 : vector<32x128xf32> to vector<32x128xbf16>
    %c2_118 = arith.constant 2 : index
    %c0_119 = arith.constant 0 : index
    %c0_120 = arith.constant 0 : index
    %156 = vector.load %arg13[%c2_118, %c0_119, %c0_120] : memref<3x128x128xbf16, #tpu.memory_space<vmem>>, vector<1x128x128xbf16>
    %157 = vector.shape_cast %156 : vector<1x128x128xbf16> to vector<128x128xbf16>
    %cst_121 = arith.constant dense<0.000000e+00> : vector<32x128xf32>
    %158 = tpu.matmul %155, %157, %cst_121 {dimension_numbers = #tpu.dot_dimension_numbers<[1], [0], [0], [1], [0, 0, 1, 1], [], []>} : vector<32x128xbf16>, vector<128x128xbf16>, vector<32x128xf32> -> vector<32x128xf32>
    %159 = arith.addf %152, %158 : vector<32x128xf32>
    %c0_122 = arith.constant 0 : index
    %c0_123 = arith.constant 0 : index
    %160 = vector.load %arg14[%c0_122, %c0_123] : memref<1x128xf32, #tpu.memory_space<vmem>>, vector<1x128xf32>
    %161 = vector.broadcast %160 : vector<1x128xf32> to vector<32x128xf32>
    %162 = arith.addf %159, %161 : vector<32x128xf32>
    %cst_124 = arith.constant dense<0.000000e+00> : vector<128xf32>
    %163 = vector.multi_reduction <add>, %162, %cst_124 [0] : vector<32x128xf32> to vector<128xf32>
    %164 = vector.shape_cast %163 : vector<128xf32> to vector<1x128xf32>
    %165 = arith.mulf %162, %162 : vector<32x128xf32>
    %cst_125 = arith.constant dense<0.000000e+00> : vector<128xf32>
    %166 = vector.multi_reduction <add>, %165, %cst_125 [0] : vector<32x128xf32> to vector<128xf32>
    %167 = vector.shape_cast %166 : vector<128xf32> to vector<1x128xf32>
    %168 = tpu.concatenate %164, %167 in 0 : vector<1x128xf32>, vector<1x128xf32> -> vector<2x128xf32>
    %c0_126 = arith.constant 0 : index
    %c0_127 = arith.constant 0 : index
    %169 = vector.load %arg1[%c0_126, %c0_127] : memref<128x8xf32, #tpu.memory_space<vmem>>, vector<128x8xf32>
    %cst_128 = arith.constant dense<0.000000e+00> : vector<2x8xf32>
    %170 = tpu.matmul %168, %169, %cst_128 {dimension_numbers = #tpu.dot_dimension_numbers<[1], [0], [0], [1], [0, 0, 1, 1], [], []>} : vector<2x128xf32>, vector<128x8xf32>, vector<2x8xf32> -> vector<2x8xf32>
    %171 = vector.extract_strided_slice %170 {offsets = [0, 0], sizes = [1, 8], strides = [1, 1]} : vector<2x8xf32> to vector<1x8xf32>
    %cst_129 = arith.constant 0.001953125 : f32
    %172 = vector.broadcast %cst_129 : f32 to vector<1x8xf32>
    %173 = arith.mulf %171, %172 : vector<1x8xf32>
    %174 = vector.extract_strided_slice %170 {offsets = [1, 0], sizes = [1, 8], strides = [1, 1]} : vector<2x8xf32> to vector<1x8xf32>
    %cst_130 = arith.constant 0.001953125 : f32
    %175 = vector.broadcast %cst_130 : f32 to vector<1x8xf32>
    %176 = arith.mulf %174, %175 : vector<1x8xf32>
    %177 = arith.mulf %173, %173 : vector<1x8xf32>
    %178 = arith.subf %176, %177 : vector<1x8xf32>
    %c0_131 = arith.constant 0 : index
    %c0_132 = arith.constant 0 : index
    %179 = vector.load %arg15[%c0_131, %c0_132] : memref<1x8xf32, #tpu.memory_space<vmem>>, vector<1x8xf32>
    %cst_133 = arith.constant 9.99999974E-6 : f32
    %180 = vector.broadcast %cst_133 : f32 to vector<1x8xf32>
    %181 = arith.addf %178, %180 : vector<1x8xf32>
    %182 = math.rsqrt %181 : vector<1x8xf32>
    %183 = arith.mulf %179, %182 : vector<1x8xf32>
    %c0_134 = arith.constant 0 : index
    %c0_135 = arith.constant 0 : index
    %184 = vector.load %arg16[%c0_134, %c0_135] : memref<1x8xf32, #tpu.memory_space<vmem>>, vector<1x8xf32>
    %185 = arith.mulf %173, %183 : vector<1x8xf32>
    %186 = arith.subf %184, %185 : vector<1x8xf32>
    %187 = tpu.concatenate %183, %186 in 0 : vector<1x8xf32>, vector<1x8xf32> -> vector<2x8xf32>
    %c0_136 = arith.constant 0 : index
    %c0_137 = arith.constant 0 : index
    %188 = vector.load %arg2[%c0_136, %c0_137] : memref<8x128xf32, #tpu.memory_space<vmem>>, vector<8x128xf32>
    %cst_138 = arith.constant dense<0.000000e+00> : vector<2x128xf32>
    %189 = tpu.matmul %187, %188, %cst_138 {dimension_numbers = #tpu.dot_dimension_numbers<[1], [0], [0], [1], [0, 0, 1, 1], [], []>} : vector<2x8xf32>, vector<8x128xf32>, vector<2x128xf32> -> vector<2x128xf32>
    %190 = vector.extract_strided_slice %189 {offsets = [0, 0], sizes = [1, 128], strides = [1, 1]} : vector<2x128xf32> to vector<1x128xf32>
    %191 = vector.broadcast %190 : vector<1x128xf32> to vector<32x128xf32>
    %192 = arith.mulf %162, %191 : vector<32x128xf32>
    %193 = vector.extract_strided_slice %189 {offsets = [1, 0], sizes = [1, 128], strides = [1, 1]} : vector<2x128xf32> to vector<1x128xf32>
    %194 = vector.broadcast %193 : vector<1x128xf32> to vector<32x128xf32>
    %195 = arith.addf %192, %194 : vector<32x128xf32>
    %cst_139 = arith.constant 0.000000e+00 : f32
    %196 = vector.broadcast %cst_139 : f32 to vector<32x128xf32>
    %197 = arith.cmpf oge, %195, %196 : vector<32x128xf32>
    %c0_140 = arith.constant 0 : index
    %c0_141 = arith.constant 0 : index
    %198 = vector.load %arg17[%c0_140, %c0_141] : memref<1x128xf32, #tpu.memory_space<vmem>>, vector<1x128xf32>
    %199 = vector.broadcast %198 : vector<1x128xf32> to vector<32x128xf32>
    %200 = arith.mulf %199, %195 : vector<32x128xf32>
    %201 = arith.select %197, %195, %200 : vector<32x128xi1>, vector<32x128xf32>
    %202 = vector.shape_cast %201 : vector<32x128xf32> to vector<2x16x128xf32>
    %c0_142 = arith.constant 0 : index
    %c0_143 = arith.constant 0 : index
    %c0_144 = arith.constant 0 : index
    %203 = vector.load %arg18[%c0_142, %c0_143, %c0_144] : memref<2x16x128xf32, #tpu.memory_space<vmem>>, vector<2x16x128xf32>
    tpu.vector_store %arg18[%c0_142, %c0_143, %c0_144], %202 {strides = array<i32>} : memref<2x16x128xf32, #tpu.memory_space<vmem>>, vector<2x16x128xf32>,
    return
  }
}

</mosaic_0001>

<llo_original>
// kernel: decoder_block_prelu.1
$region0: #{decoder_block_prelu.1}
  #allocation0 [shape = 'u32[]', space=smem, size = 0x4, offset = 0x4, fixed_abs, tag = 'smem constant byte address 0x4 - core index']
  #allocation1 [shape = 'u32[144,128]{1,0:T(1,128)}', space=vmem, size = 0x12000, scoped, tag = 'internal scratch']
  #allocation2 [shape = 'f32[2,18,64]{2,1,0:T(8,128)}', space=vmem, size = 0x6000, scoped, tag = 'scratch operand']
  #allocation3 [shape = 'f32[2,18,128]{2,1,0:T(8,128)}', space=vmem, size = 0x6000, scoped, tag = 'scratch operand']
  %s0 = inlined_call_operand.vmem [shape: f32[2,16,64], index: 0, kind: input, shape index: {}]
  %s1 = inlined_call_operand.vmem [shape: f32[128,8], index: 1, kind: input, shape index: {}]
  %s2 = inlined_call_operand.vmem [shape: f32[8,128], index: 2, kind: input, shape index: {}]
  %s3 = inlined_call_operand.vmem [shape: bf16[3,64,128], index: 3, kind: input, shape index: {}]
  %s4 = inlined_call_operand.vmem [shape: f32[1,128], index: 4, kind: input, shape index: {}]
  %s5 = inlined_call_operand.vmem [shape: f32[1,8], index: 5, kind: input, shape index: {}]
  %s6 = inlined_call_operand.vmem [shape: f32[1,8], index: 6, kind: input, shape index: {}]
  %s7 = inlined_call_operand.vmem [shape: f32[1,128], index: 7, kind: input, shape index: {}]
  %s8 = inlined_call_operand.vmem [shape: bf16[3,128,128], index: 8, kind: input, shape index: {}]
  %s9 = inlined_call_operand.vmem [shape: f32[1,128], index: 9, kind: input, shape index: {}]
  %s10 = inlined_call_operand.vmem [shape: f32[1,8], index: 10, kind: input, shape index: {}]
  %s11 = inlined_call_operand.vmem [shape: f32[1,8], index: 11, kind: input, shape index: {}]
  %s12 = inlined_call_operand.vmem [shape: f32[1,128], index: 12, kind: input, shape index: {}]
  %s13 = inlined_call_operand.vmem [shape: bf16[3,128,128], index: 13, kind: input, shape index: {}]
  %s14 = inlined_call_operand.vmem [shape: f32[1,128], index: 14, kind: input, shape index: {}]
  %s15 = inlined_call_operand.vmem [shape: f32[1,8], index: 15, kind: input, shape index: {}]
  %s16 = inlined_call_operand.vmem [shape: f32[1,8], index: 16, kind: input, shape index: {}]
  %s17 = inlined_call_operand.vmem [shape: f32[1,128], index: 17, kind: input, shape index: {}]
  %s18 = inlined_call_operand.vmem [shape: f32[2,16,128], index: 18, kind: output, shape index: {}]
  %s19 = sld [smem:[#allocation0]]
  $region82: #{decoder_block_prelu.1} parent=0
    _
  %s21 = ssub.s32 1, %s19
  %s22 = scalar_select 0, %s21, %s19
  // Predicated region
  $region2: #{decoder_block_prelu.1} parent=0 // pred_check
    _
  $region3: #{decoder_block_prelu.1} parent=0 // pred_check_branch
    %24 = sbr.rel (0) target = $region5
  $region4: #{decoder_block_prelu.1} parent=0 // pred_region
    _
  $region5: #{decoder_block_prelu.1} parent=0 // pred_fallthru
    _
  // Predicated region
  $region6: #{decoder_block_prelu.1} parent=0 // pred_check
    _
  $region7: #{decoder_block_prelu.1} parent=0 // pred_check_branch
    %26 = sbr.rel (0) target = $region9
  $region8: #{decoder_block_prelu.1} parent=0 // pred_region
    _
  $region9: #{decoder_block_prelu.1} parent=0 // pred_fallthru
    _
  // Predicated region
  $region10: #{decoder_block_prelu.1} parent=0 // pred_check
    _
  $region11: #{decoder_block_prelu.1} parent=0 // pred_check_branch
    %28 = sbr.rel (0) target = $region13
  $region12: #{decoder_block_prelu.1} parent=0 // pred_region
    _
  $region13: #{decoder_block_prelu.1} parent=0 // pred_fallthru
    _
  // Predicated region
  $region14: #{decoder_block_prelu.1} parent=0 // pred_check
    _
  $region15: #{decoder_block_prelu.1} parent=0 // pred_check_branch
    %30 = sbr.rel (0) target = $region17
  $region16: #{decoder_block_prelu.1} parent=0 // pred_region
    _
  $region17: #{decoder_block_prelu.1} parent=0 // pred_fallthru
    _
  // Predicated region
  $region18: #{decoder_block_prelu.1} parent=0 // pred_check
    _
  $region19: #{decoder_block_prelu.1} parent=0 // pred_check_branch
    %32 = sbr.rel (0) target = $region21
  $region20: #{decoder_block_prelu.1} parent=0 // pred_region
    _
  $region21: #{decoder_block_prelu.1} parent=0 // pred_fallthru
    _
  // Predicated region
  $region22: #{decoder_block_prelu.1} parent=0 // pred_check
    _
  $region23: #{decoder_block_prelu.1} parent=0 // pred_check_branch
    %34 = sbr.rel (0) target = $region25
  $region24: #{decoder_block_prelu.1} parent=0 // pred_region
    _
  $region25: #{decoder_block_prelu.1} parent=0 // pred_fallthru
    _
  // Predicated region
  $region26: #{decoder_block_prelu.1} parent=0 // pred_check
    _
  $region27: #{decoder_block_prelu.1} parent=0 // pred_check_branch
    %36 = sbr.rel (0) target = $region29
  $region28: #{decoder_block_prelu.1} parent=0 // pred_region
    _
  $region29: #{decoder_block_prelu.1} parent=0 // pred_fallthru
    _
  // Predicated region
  $region30: #{decoder_block_prelu.1} parent=0 // pred_check
    _
  $region31: #{decoder_block_prelu.1} parent=0 // pred_check_branch
    %38 = sbr.rel (0) target = $region33
  $region32: #{decoder_block_prelu.1} parent=0 // pred_region
    _
  $region33: #{decoder_block_prelu.1} parent=0 // pred_fallthru
    _
  // Predicated region
  $region34: #{decoder_block_prelu.1} parent=0 // pred_check
    _
  $region35: #{decoder_block_prelu.1} parent=0 // pred_check_branch
    %40 = sbr.rel (0) target = $region37
  $region36: #{decoder_block_prelu.1} parent=0 // pred_region
    _
  $region37: #{decoder_block_prelu.1} parent=0 // pred_fallthru
    _
  // Predicated region
  $region38: #{decoder_block_prelu.1} parent=0 // pred_check
    _
  $region39: #{decoder_block_prelu.1} parent=0 // pred_check_branch
    %42 = sbr.rel (0) target = $region41
  $region40: #{decoder_block_prelu.1} parent=0 // pred_region
    _
  $region41: #{decoder_block_prelu.1} parent=0 // pred_fallthru
    _
  // Predicated region
  $region42: #{decoder_block_prelu.1} parent=0 // pred_check
    _
  $region43: #{decoder_block_prelu.1} parent=0 // pred_check_branch
    %44 = sbr.rel (0) target = $region45
  $region44: #{decoder_block_prelu.1} parent=0 // pred_region
    _
  $region45: #{decoder_block_prelu.1} parent=0 // pred_fallthru
    _
  // Predicated region
  $region46: #{decoder_block_prelu.1} parent=0 // pred_check
    _
  $region47: #{decoder_block_prelu.1} parent=0 // pred_check_branch
    %46 = sbr.rel (0) target = $region49
  $region48: #{decoder_block_prelu.1} parent=0 // pred_region
    _
  $region49: #{decoder_block_prelu.1} parent=0 // pred_fallthru
    _
  // Predicated region
  $region50: #{decoder_block_prelu.1} parent=0 // pred_check
    _
  $region51: #{decoder_block_prelu.1} parent=0 // pred_check_branch
    %48 = sbr.rel (0) target = $region53
  $region52: #{decoder_block_prelu.1} parent=0 // pred_region
    _
  $region53: #{decoder_block_prelu.1} parent=0 // pred_fallthru
    _
  // Predicated region
  $region54: #{decoder_block_prelu.1} parent=0 // pred_check
    _
  $region55: #{decoder_block_prelu.1} parent=0 // pred_check_branch
    %50 = sbr.rel (0) target = $region57
  $region56: #{decoder_block_prelu.1} parent=0 // pred_region
    _
  $region57: #{decoder_block_prelu.1} parent=0 // pred_fallthru
    _
  // Predicated region
  $region58: #{decoder_block_prelu.1} parent=0 // pred_check
    _
  $region59: #{decoder_block_prelu.1} parent=0 // pred_check_branch
    %52 = sbr.rel (0) target = $region61
  $region60: #{decoder_block_prelu.1} parent=0 // pred_region
    _
  $region61: #{decoder_block_prelu.1} parent=0 // pred_fallthru
    _
  // Predicated region
  $region62: #{decoder_block_prelu.1} parent=0 // pred_check
    _
  $region63: #{decoder_block_prelu.1} parent=0 // pred_check_branch
    %54 = sbr.rel (0) target = $region65
  $region64: #{decoder_block_prelu.1} parent=0 // pred_region
    _
  $region65: #{decoder_block_prelu.1} parent=0 // pred_fallthru
    _
  // Predicated region
  $region66: #{decoder_block_prelu.1} parent=0 // pred_check
    _
  $region67: #{decoder_block_prelu.1} parent=0 // pred_check_branch
    %56 = sbr.rel (0) target = $region69
  $region68: #{decoder_block_prelu.1} parent=0 // pred_region
    _
  $region69: #{decoder_block_prelu.1} parent=0 // pred_fallthru
    _
  // Predicated region
  $region70: #{decoder_block_prelu.1} parent=0 // pred_check
    _
  $region71: #{decoder_block_prelu.1} parent=0 // pred_check_branch
    %58 = sbr.rel (0) target = $region73
  $region72: #{decoder_block_prelu.1} parent=0 // pred_region
    _
  $region73: #{decoder_block_prelu.1} parent=0 // pred_fallthru
    _
  %vm60 = vcmask 523264
  %61 = vst.msk [vmem:[#allocation2] sm:$0xff] %vm60, 0.0
  %62 = vst.msk [vmem:[#allocation2 + $0x8] sm:$0xff] %vm60, 0.0
  %vm63 = vcmask 517120
  %64 = vst.msk [vmem:[#allocation2 + $0x10] sm:$0x3] %vm63, 0.0
  %65 = vst.msk [vmem:[#allocation2 + $0x18] sm:$0xff] %vm60, 0.0
  %66 = vst.msk [vmem:[#allocation2 + $0x20] sm:$0xff] %vm60, 0.0
  %67 = vst.msk [vmem:[#allocation2 + $0x28] sm:$0x3] %vm63, 0.0
  %v68 = vld [vmem:[%s0] sm:$0xff]
  %v69 = vld [vmem:[%s0 + $0x8] sm:$0xff]
  %v70 = vld [vmem:[%s0 + $0x10] sm:$0xff]
  %v71 = vld [vmem:[%s0 + $0x18] sm:$0xff]
  %72 = vst.msk [vmem:[#allocation2 + $0x1] sm:$0xff] %vm60, %v68
  %73 = vst.msk [vmem:[#allocation2 + $0x9] sm:$0xff] %vm60, %v69
  %74 = vst.msk [vmem:[#allocation2 + $0x19] sm:$0xff] %vm60, %v70
  %75 = vst.msk [vmem:[#allocation2 + $0x21] sm:$0xff] %vm60, %v71
  %76 = vst [vmem:[#allocation3] sm:$0xff] 0.0
  %77 = vst [vmem:[#allocation3 + $0x8] sm:$0xff] 0.0
  %78 = vst [vmem:[#allocation3 + $0x10] sm:$0x3] 0.0
  %79 = vst [vmem:[#allocation3 + $0x18] sm:$0xff] 0.0
  %80 = vst [vmem:[#allocation3 + $0x20] sm:$0xff] 0.0
  %81 = vst [vmem:[#allocation3 + $0x28] sm:$0x3] 0.0
  %v82 = vld [vmem:[#allocation2] sm:$0xff]
  %v83 = vld [vmem:[#allocation2 + $0x8] sm:$0xff]
  %v84 = vld [vmem:[#allocation2 + $0x18] sm:$0xff]
  %v85 = vld [vmem:[#allocation2 + $0x20] sm:$0xff]
  %v86 = vpack.c.bf16 %v83, %v82
  %v87 = vpack.c.bf16 %v85, %v84
  %v88 = vld [vmem:[%s3] sm:$0xf]
  %v89 = vld [vmem:[%s3 + $0x4] sm:$0xf]
  %v90 = vld [vmem:[%s3 + $0x8] sm:$0xf]
  %v91 = vld [vmem:[%s3 + $0xc] sm:$0xf]
  %v92 = vld [vmem:[%s3 + $0x10] sm:$0xf]
  %v93 = vld [vmem:[%s3 + $0x14] sm:$0xf]
  %v94 = vld [vmem:[%s3 + $0x18] sm:$0xf]
  %v95 = vld [vmem:[%s3 + $0x1c] sm:$0xf]
  %v96 = vld [vmem:[#allocation2 + $0x1] sm:$0xff]
  %v97 = vld [vmem:[#allocation2 + $0x9] sm:$0xff]
  %v98 = vld [vmem:[#allocation2 + $0x19] sm:$0xff]
  %v99 = vld [vmem:[#allocation2 + $0x21] sm:$0xff]
  %v100 = vpack.c.bf16 %v97, %v96
  %v101 = vpack.c.bf16 %v99, %v98
  %s102 = scalar_lea.vmem %s3, 32
  %v103 = vld [vmem:[%s102] sm:$0xf]
  %v104 = vld [vmem:[%s102 + $0x4] sm:$0xf]
  %v105 = vld [vmem:[%s102 + $0x8] sm:$0xf]
  %v106 = vld [vmem:[%s102 + $0xc] sm:$0xf]
  %v107 = vld [vmem:[%s102 + $0x10] sm:$0xf]
  %v108 = vld [vmem:[%s102 + $0x14] sm:$0xf]
  %v109 = vld [vmem:[%s102 + $0x18] sm:$0xf]
  %v110 = vld [vmem:[%s102 + $0x1c] sm:$0xf]
  %v119 = vunpack.c.l.b16 %v103
  %v120 = vunpack.c.l.b16 %v104
  %v121 = vunpack.c.l.b16 %v105
  %v122 = vunpack.c.l.b16 %v106
  %v123 = vunpack.c.l.b16 %v107
  %v124 = vunpack.c.l.b16 %v108
  %v125 = vunpack.c.l.b16 %v109
  %v126 = vunpack.c.l.b16 %v110
  %v127 = vpack.c.b16 %v120, %v119
  %v128 = vpack.c.b16 %v122, %v121
  %v129 = vpack.c.b16 %v124, %v123
  %v130 = vpack.c.b16 %v126, %v125
  %v136 = vsel %vm60, %v100, 0
  %v139 = vsel %vm60, %v101, 0
  %141 = vmatprep.subr.bf16.mxu0 0
  %142 = vmatpush1.bf16.msra.mxu0 %v127
  %143 = vmatprep.subr.bf16.mxu0 0
  %144 = vmatpush1.bf16.msra.mxu0 %v128
  %145 = vmatprep.subr.bf16.mxu0 0
  %146 = vmatpush1.bf16.msra.mxu0 %v129
  %147 = vmatprep.subr.bf16.mxu0 0
  %148 = vmatpush1.bf16.msra.mxu0 %v130
  %149 = vmatprep.subr.bf16.mxu0 0
  %150 = vmatpush1.bf16.msra.mxu0 0
  %151 = vmatprep.subr.bf16.mxu0 0
  %152 = vmatpush1.bf16.msra.mxu0 0
  %153 = vmatprep.subr.bf16.mxu0 0
  %154 = vmatpush1.bf16.msra.mxu0 0
  %155 = vmatprep.subr.bf16.mxu0 0
  %156 = vmatpush1.bf16.msra.mxu0 0
  %157 = vmatprep.subr.bf16.mxu0 0
  %158 = vmatpush1.bf16.msra.mxu0 0
  %159 = vmatprep.subr.bf16.mxu0 0
  %160 = vmatpush1.bf16.msra.mxu0 0
  %161 = vmatprep.subr.bf16.mxu0 0
  %162 = vmatpush1.bf16.msra.mxu0 0
  %163 = vmatprep.subr.bf16.mxu0 0
  %164 = vmatpush1.bf16.msra.mxu0 0
  %165 = vmatprep.subr.bf16.mxu0 0
  %166 = vmatpush1.bf16.msra.mxu0 0
  %167 = vmatprep.subr.bf16.mxu0 0
  %168 = vmatpush1.bf16.msra.mxu0 0
  %169 = vmatprep.subr.bf16.mxu0 0
  %170 = vmatpush1.bf16.msra.mxu0 0
  %171 = vmatprep.subr.bf16.mxu0 0
  %172 = vmatpush1.bf16.msra.mxu0 0
  %173 = vmatprep.mubr.bf16.mxu0 0
  %174 = vmatmul.mubr.bf16.gmra.mrb[0].mxu0 %v136
  %v175 = vpop.f32.mrb[0].mxu0
  %v176 = vadd.f32 0.0, %v175
  %v177 = vpop.f32.mrb[0].mxu0
  %v178 = vpop.f32.mrb[0].mxu0
  %v179 = vadd.f32 0.0, %v178
  %v180 = vpop.f32.mrb[0].mxu0
  %181 = vmatprep.mubr.bf16.mxu0 0
  %182 = vmatmul.mubr.bf16.gmra.mrb[0].mxu0 %v139
  %v183 = vpop.f32.mrb[0].mxu0
  %v184 = vadd.f32 0.0, %v183
  %v185 = vpop.f32.mrb[0].mxu0
  %v186 = vpop.f32.mrb[0].mxu0
  %v187 = vadd.f32 0.0, %v186
  %v188 = vpop.f32.mrb[0].mxu0
  %189 = vdwg.mxu0
  %v198 = vunpack.c.l.b16 %v88
  %v199 = vunpack.c.l.b16 %v89
  %v200 = vunpack.c.l.b16 %v90
  %v201 = vunpack.c.l.b16 %v91
  %v202 = vunpack.c.l.b16 %v92
  %v203 = vunpack.c.l.b16 %v93
  %v204 = vunpack.c.l.b16 %v94
  %v205 = vunpack.c.l.b16 %v95
  %v206 = vpack.c.b16 %v199, %v198
  %v207 = vpack.c.b16 %v201, %v200
  %v208 = vpack.c.b16 %v203, %v202
  %v209 = vpack.c.b16 %v205, %v204
  %v215 = vsel %vm60, %v86, 0
  %v218 = vsel %vm60, %v87, 0
  %220 = vmatprep.subr.bf16.mxu0 0
  %221 = vmatpush1.bf16.msra.mxu0 %v206
  %222 = vmatprep.subr.bf16.mxu0 0
  %223 = vmatpush1.bf16.msra.mxu0 %v207
  %224 = vmatprep.subr.bf16.mxu0 0
  %225 = vmatpush1.bf16.msra.mxu0 %v208
  %226 = vmatprep.subr.bf16.mxu0 0
  %227 = vmatpush1.bf16.msra.mxu0 %v209
  %228 = vmatprep.subr.bf16.mxu0 0
  %229 = vmatpush1.bf16.msra.mxu0 0
  %230 = vmatprep.subr.bf16.mxu0 0
  %231 = vmatpush1.bf16.msra.mxu0 0
  %232 = vmatprep.subr.bf16.mxu0 0
  %233 = vmatpush1.bf16.msra.mxu0 0
  %234 = vmatprep.subr.bf16.mxu0 0
  %235 = vmatpush1.bf16.msra.mxu0 0
  %236 = vmatprep.subr.bf16.mxu0 0
  %237 = vmatpush1.bf16.msra.mxu0 0
  %238 = vmatprep.subr.bf16.mxu0 0
  %239 = vmatpush1.bf16.msra.mxu0 0
  %240 = vmatprep.subr.bf16.mxu0 0
  %241 = vmatpush1.bf16.msra.mxu0 0
  %242 = vmatprep.subr.bf16.mxu0 0
  %243 = vmatpush1.bf16.msra.mxu0 0
  %244 = vmatprep.subr.bf16.mxu0 0
  %245 = vmatpush1.bf16.msra.mxu0 0
  %246 = vmatprep.subr.bf16.mxu0 0
  %247 = vmatpush1.bf16.msra.mxu0 0
  %248 = vmatprep.subr.bf16.mxu0 0
  %249 = vmatpush1.bf16.msra.mxu0 0
  %250 = vmatprep.subr.bf16.mxu0 0
  %251 = vmatpush1.bf16.msra.mxu0 0
  %252 = vmatprep.mubr.bf16.mxu0 0
  %253 = vmatmul.mubr.bf16.gmra.mrb[0].mxu0 %v215
  %v254 = vpop.f32.mrb[0].mxu0
  %v255 = vadd.f32 %v176, %v254
  %v256 = vpop.f32.mrb[0].mxu0
  %v257 = vpop.f32.mrb[0].mxu0
  %v258 = vadd.f32 %v179, %v257
  %v259 = vpop.f32.mrb[0].mxu0
  %260 = vmatprep.mubr.bf16.mxu0 0
  %261 = vmatmul.mubr.bf16.gmra.mrb[0].mxu0 %v218
  %v262 = vpop.f32.mrb[0].mxu0
  %v263 = vadd.f32 %v184, %v262
  %v264 = vpop.f32.mrb[0].mxu0
  %v265 = vpop.f32.mrb[0].mxu0
  %v266 = vadd.f32 %v187, %v265
  %v267 = vpop.f32.mrb[0].mxu0
  %268 = vdwg.mxu0
  %v269 = vld [vmem:[#allocation2 + $0x2] sm:$0xff]
  %v270 = vld [vmem:[#allocation2 + $0xa] sm:$0xff]
  %v271 = vld [vmem:[#allocation2 + $0x1a] sm:$0xff]
  %v272 = vld [vmem:[#allocation2 + $0x22] sm:$0xff]
  %v273 = vpack.c.bf16 %v270, %v269
  %v274 = vpack.c.bf16 %v272, %v271
  %s275 = scalar_lea.vmem %s3, 64
  %v276 = vld [vmem:[%s275] sm:$0xf]
  %v277 = vld [vmem:[%s275 + $0x4] sm:$0xf]
  %v278 = vld [vmem:[%s275 + $0x8] sm:$0xf]
  %v279 = vld [vmem:[%s275 + $0xc] sm:$0xf]
  %v280 = vld [vmem:[%s275 + $0x10] sm:$0xf]
  %v281 = vld [vmem:[%s275 + $0x14] sm:$0xf]
  %v282 = vld [vmem:[%s275 + $0x18] sm:$0xf]
  %v283 = vld [vmem:[%s275 + $0x1c] sm:$0xf]
  %v292 = vunpack.c.l.b16 %v276
  %v293 = vunpack.c.l.b16 %v277
  %v294 = vunpack.c.l.b16 %v278
  %v295 = vunpack.c.l.b16 %v279
  %v296 = vunpack.c.l.b16 %v280
  %v297 = vunpack.c.l.b16 %v281
  %v298 = vunpack.c.l.b16 %v282
  %v299 = vunpack.c.l.b16 %v283
  %v300 = vpack.c.b16 %v293, %v292
  %v301 = vpack.c.b16 %v295, %v294
  %v302 = vpack.c.b16 %v297, %v296
  %v303 = vpack.c.b16 %v299, %v298
  %v309 = vsel %vm60, %v273, 0
  %v312 = vsel %vm60, %v274, 0
  %314 = vmatprep.subr.bf16.mxu0 0
  %315 = vmatpush1.bf16.msra.mxu0 %v300
  %316 = vmatprep.subr.bf16.mxu0 0
  %317 = vmatpush1.bf16.msra.mxu0 %v301
  %318 = vmatprep.subr.bf16.mxu0 0
  %319 = vmatpush1.bf16.msra.mxu0 %v302
  %320 = vmatprep.subr.bf16.mxu0 0
  %321 = vmatpush1.bf16.msra.mxu0 %v303
  %322 = vmatprep.subr.bf16.mxu0 0
  %323 = vmatpush1.bf16.msra.mxu0 0
  %324 = vmatprep.subr.bf16.mxu0 0
  %325 = vmatpush1.bf16.msra.mxu0 0
  %326 = vmatprep.subr.bf16.mxu0 0
  %327 = vmatpush1.bf16.msra.mxu0 0
  %328 = vmatprep.subr.bf16.mxu0 0
  %329 = vmatpush1.bf16.msra.mxu0 0
  %330 = vmatprep.subr.bf16.mxu0 0
  %331 = vmatpush1.bf16.msra.mxu0 0
  %332 = vmatprep.subr.bf16.mxu0 0
  %333 = vmatpush1.bf16.msra.mxu0 0
  %334 = vmatprep.subr.bf16.mxu0 0
  %335 = vmatpush1.bf16.msra.mxu0 0
  %336 = vmatprep.subr.bf16.mxu0 0
  %337 = vmatpush1.bf16.msra.mxu0 0
  %338 = vmatprep.subr.bf16.mxu0 0
  %339 = vmatpush1.bf16.msra.mxu0 0
  %340 = vmatprep.subr.bf16.mxu0 0
  %341 = vmatpush1.bf16.msra.mxu0 0
  %342 = vmatprep.subr.bf16.mxu0 0
  %343 = vmatpush1.bf16.msra.mxu0 0
  %344 = vmatprep.subr.bf16.mxu0 0
  %345 = vmatpush1.bf16.msra.mxu0 0
  %346 = vmatprep.mubr.bf16.mxu0 0
  %347 = vmatmul.mubr.bf16.gmra.mrb[0].mxu0 %v309
  %v348 = vpop.f32.mrb[0].mxu0
  %v349 = vadd.f32 0.0, %v348
  %v350 = vpop.f32.mrb[0].mxu0
  %v351 = vpop.f32.mrb[0].mxu0
  %v352 = vadd.f32 0.0, %v351
  %v353 = vpop.f32.mrb[0].mxu0
  %354 = vmatprep.mubr.bf16.mxu0 0
  %355 = vmatmul.mubr.bf16.gmra.mrb[0].mxu0 %v312
  %v356 = vpop.f32.mrb[0].mxu0
  %v357 = vadd.f32 0.0, %v356
  %v358 = vpop.f32.mrb[0].mxu0
  %v359 = vpop.f32.mrb[0].mxu0
  %v360 = vadd.f32 0.0, %v359
  %v361 = vpop.f32.mrb[0].mxu0
  %362 = vdwg.mxu0
  %v363 = vadd.f32 %v255, %v349
  %v364 = vadd.f32 %v258, %v352
  %v365 = vadd.f32 %v263, %v357
  %v366 = vadd.f32 %v266, %v360
  %v367 = vld [vmem:[%s4] sm:$0x1]
  %v369 = vlaneseq
  %v370 = vshrl.u32 %v369, 7
  %v371 = vsub.s32 0, %v370
  %v372 = vrot.slane %v367, %v371
  %v374 = vadd.f32 %v363, %v372
  %v375 = vadd.f32 %v364, %v372
  %v376 = vadd.f32 %v365, %v372
  %v377 = vadd.f32 %v366, %v372
  %v378 = vadd.f32 %v374, %v375
  %v379 = vadd.f32 %v378, %v376
  %v380 = vadd.f32 %v379, %v377
  %v381 = vrot.slane %v380, 4
  %v382 = vadd.f32 %v380, %v381
  %v383 = vrot.slane %v382, 2
  %v384 = vadd.f32 %v382, %v383
  %v385 = vrot.slane %v384, 1
  %v386 = vadd.f32 %v384, %v385
  %v387 = vmul.f32 %v374, %v374
  %v388 = vmul.f32 %v375, %v375
  %v389 = vmul.f32 %v376, %v376
  %v390 = vmul.f32 %v377, %v377
  %v391 = vadd.f32 %v387, %v388
  %v392 = vadd.f32 %v391, %v389
  %v393 = vadd.f32 %v392, %v390
  %v394 = vrot.slane %v393, 4
  %v395 = vadd.f32 %v393, %v394
  %v396 = vrot.slane %v395, 2
  %v397 = vadd.f32 %v395, %v396
  %v398 = vrot.slane %v397, 1
  %v399 = vadd.f32 %v397, %v398
  %vm400 = vcmask 1040384
  %v401 = vsel %vm400, %v386, %v399
  %v402 = vld [vmem:[%s1] sm:$0xff]
  %v403 = vld [vmem:[%s1 + $0x8] sm:$0xff]
  %v404 = vld [vmem:[%s1 + $0x10] sm:$0xff]
  %v405 = vld [vmem:[%s1 + $0x18] sm:$0xff]
  %v406 = vld [vmem:[%s1 + $0x20] sm:$0xff]
  %v407 = vld [vmem:[%s1 + $0x28] sm:$0xff]
  %v408 = vld [vmem:[%s1 + $0x30] sm:$0xff]
  %v409 = vld [vmem:[%s1 + $0x38] sm:$0xff]
  %v410 = vld [vmem:[%s1 + $0x40] sm:$0xff]
  %v411 = vld [vmem:[%s1 + $0x48] sm:$0xff]
  %v412 = vld [vmem:[%s1 + $0x50] sm:$0xff]
  %v413 = vld [vmem:[%s1 + $0x58] sm:$0xff]
  %v414 = vld [vmem:[%s1 + $0x60] sm:$0xff]
  %v415 = vld [vmem:[%s1 + $0x68] sm:$0xff]
  %v416 = vld [vmem:[%s1 + $0x70] sm:$0xff]
  %v417 = vld [vmem:[%s1 + $0x78] sm:$0xff]
  %418 = vmatprep.subr.mxu0 0.0
  %419 = vmatpush1.msra.mxu0 %v402
  %420 = vmatprep.subr.mxu0 0.0
  %421 = vmatpush1.msra.mxu0 %v403
  %422 = vmatprep.subr.mxu0 0.0
  %423 = vmatpush1.msra.mxu0 %v404
  %424 = vmatprep.subr.mxu0 0.0
  %425 = vmatpush1.msra.mxu0 %v405
  %426 = vmatprep.subr.mxu0 0.0
  %427 = vmatpush1.msra.mxu0 %v406
  %428 = vmatprep.subr.mxu0 0.0
  %429 = vmatpush1.msra.mxu0 %v407
  %430 = vmatprep.subr.mxu0 0.0
  %431 = vmatpush1.msra.mxu0 %v408
  %432 = vmatprep.subr.mxu0 0.0
  %433 = vmatpush1.msra.mxu0 %v409
  %434 = vmatprep.subr.mxu0 0.0
  %435 = vmatpush1.msra.mxu0 %v410
  %436 = vmatprep.subr.mxu0 0.0
  %437 = vmatpush1.msra.mxu0 %v411
  %438 = vmatprep.subr.mxu0 0.0
  %439 = vmatpush1.msra.mxu0 %v412
  %440 = vmatprep.subr.mxu0 0.0
  %441 = vmatpush1.msra.mxu0 %v413
  %442 = vmatprep.subr.mxu0 0.0
  %443 = vmatpush1.msra.mxu0 %v414
  %444 = vmatprep.subr.mxu0 0.0
  %445 = vmatpush1.msra.mxu0 %v415
  %446 = vmatprep.subr.mxu0 0.0
  %447 = vmatpush1.msra.mxu0 %v416
  %448 = vmatprep.subr.mxu0 0.0
  %449 = vmatpush1.msra.mxu0 %v417
  %450 = vmatprep.subr.mxu0 0.0
  %451 = vmatpush1.msra.mxu0 0.0
  %452 = vmatprep.subr.mxu0 0.0
  %453 = vmatpush1.msra.mxu0 0.0
  %454 = vmatprep.subr.mxu0 0.0
  %455 = vmatpush1.msra.mxu0 0.0
  %456 = vmatprep.subr.mxu0 0.0
  %457 = vmatpush1.msra.mxu0 0.0
  %458 = vmatprep.subr.mxu0 0.0
  %459 = vmatpush1.msra.mxu0 0.0
  %460 = vmatprep.subr.mxu0 0.0
  %461 = vmatpush1.msra.mxu0 0.0
  %462 = vmatprep.subr.mxu0 0.0
  %463 = vmatpush1.msra.mxu0 0.0
  %464 = vmatprep.subr.mxu0 0.0
  %465 = vmatpush1.msra.mxu0 0.0
  %466 = vmatprep.subr.mxu0 0.0
  %467 = vmatpush1.msra.mxu0 0.0
  %468 = vmatprep.subr.mxu0 0.0
  %469 = vmatpush1.msra.mxu0 0.0
  %470 = vmatprep.subr.mxu0 0.0
  %471 = vmatpush1.msra.mxu0 0.0
  %472 = vmatprep.subr.mxu0 0.0
  %473 = vmatpush1.msra.mxu0 0.0
  %474 = vmatprep.subr.mxu0 0.0
  %475 = vmatpush1.msra.mxu0 0.0
  %476 = vmatprep.subr.mxu0 0.0
  %477 = vmatpush1.msra.mxu0 0.0
  %478 = vmatprep.subr.mxu0 0.0
  %479 = vmatpush1.msra.mxu0 0.0
  %480 = vmatprep.subr.mxu0 0.0
  %481 = vmatpush1.msra.mxu0 0.0
  %482 = vmatprep.mubr.f32.mxu0 0.0
  %483 = vmatmul.mubr.f32.gmra.mrb[0].mxu0 %v401
  %v484 = vpop.f32.mrb[0].mxu0
  %v485 = vadd.f32 0.0, %v484
  %v486 = vpop.f32.mrb[0].mxu0
  %487 = vdwg.mxu0
  %v488 = vmul.f32 %v485, 0.001953125
  %v489 = vmul.f32 %v488, %v488
  %v491 = vrot.slane %v489, 7
  %v493 = vsub.f32 %v488, %v491
  %v494 = vld [vmem:[%s5] sm:$0x1]
  %v495 = vadd.f32 %v493, 1e-05
  %v496 = vrsqrt.pop %v495
  %v499 = vunpack.c.l.s4 1966171168
  %v500 = vunpack.c.0.s8 %v499
  %v501 = vlaneseq
  %v502 = vshrl.u32 %v501, 7
  %v503 = vsub.s32 %v500, %v502
  %v504 = vrot.slane %v496, %v503
  %v505 = vcombine.high %v504, %v504
  %v507 = vunpack.c.l.s4 1966171168
  %v508 = vunpack.c.0.s8 %v507
  %v509 = vlaneseq
  %v510 = vshrl.u32 %v509, 7
  %v511 = vsub.s32 %v508, %v510
  %v512 = vrot.slane %v505, %v511
  %v514 = vmul.f32 %v494, %v512
  %v515 = vld [vmem:[%s6] sm:$0x1]
  %v516 = vmul.f32 %v488, %v514
  %v517 = vsub.f32 %v515, %v516
  %v519 = vlaneseq
  %v520 = vshrl.u32 %v519, 7
  %v521 = vsub.s32 0, %v520
  %v522 = vrot.slane %v517, %v521
  %v524 = vsel %vm400, %v514, %v522
  %v525 = vld [vmem:[%s2] sm:$0xff]
  %vm526 = vcmask 64512
  %v528 = vsel %vm526, %v524, 0
  %530 = vmatprep.subr.mxu0 0.0
  %531 = vmatpush1.msra.mxu0 %v525
  %532 = vmatprep.subr.mxu0 0.0
  %533 = vmatpush1.msra.mxu0 0.0
  %534 = vmatprep.subr.mxu0 0.0
  %535 = vmatpush1.msra.mxu0 0.0
  %536 = vmatprep.subr.mxu0 0.0
  %537 = vmatpush1.msra.mxu0 0.0
  %538 = vmatprep.subr.mxu0 0.0
  %539 = vmatpush1.msra.mxu0 0.0
  %540 = vmatprep.subr.mxu0 0.0
  %541 = vmatpush1.msra.mxu0 0.0
  %542 = vmatprep.subr.mxu0 0.0
  %543 = vmatpush1.msra.mxu0 0.0
  %544 = vmatprep.subr.mxu0 0.0
  %545 = vmatpush1.msra.mxu0 0.0
  %546 = vmatprep.subr.mxu0 0.0
  %547 = vmatpush1.msra.mxu0 0.0
  %548 = vmatprep.subr.mxu0 0.0
  %549 = vmatpush1.msra.mxu0 0.0
  %550 = vmatprep.subr.mxu0 0.0
  %551 = vmatpush1.msra.mxu0 0.0
  %552 = vmatprep.subr.mxu0 0.0
  %553 = vmatpush1.msra.mxu0 0.0
  %554 = vmatprep.subr.mxu0 0.0
  %555 = vmatpush1.msra.mxu0 0.0
  %556 = vmatprep.subr.mxu0 0.0
  %557 = vmatpush1.msra.mxu0 0.0
  %558 = vmatprep.subr.mxu0 0.0
  %559 = vmatpush1.msra.mxu0 0.0
  %560 = vmatprep.subr.mxu0 0.0
  %561 = vmatpush1.msra.mxu0 0.0
  %562 = vmatprep.subr.mxu0 0.0
  %563 = vmatpush1.msra.mxu0 0.0
  %564 = vmatprep.subr.mxu0 0.0
  %565 = vmatpush1.msra.mxu0 0.0
  %566 = vmatprep.subr.mxu0 0.0
  %567 = vmatpush1.msra.mxu0 0.0
  %568 = vmatprep.subr.mxu0 0.0
  %569 = vmatpush1.msra.mxu0 0.0
  %570 = vmatprep.subr.mxu0 0.0
  %571 = vmatpush1.msra.mxu0 0.0
  %572 = vmatprep.subr.mxu0 0.0
  %573 = vmatpush1.msra.mxu0 0.0
  %574 = vmatprep.subr.mxu0 0.0
  %575 = vmatpush1.msra.mxu0 0.0
  %576 = vmatprep.subr.mxu0 0.0
  %577 = vmatpush1.msra.mxu0 0.0
  %578 = vmatprep.subr.mxu0 0.0
  %579 = vmatpush1.msra.mxu0 0.0
  %580 = vmatprep.subr.mxu0 0.0
  %581 = vmatpush1.msra.mxu0 0.0
  %582 = vmatprep.subr.mxu0 0.0
  %583 = vmatpush1.msra.mxu0 0.0
  %584 = vmatprep.subr.mxu0 0.0
  %585 = vmatpush1.msra.mxu0 0.0
  %586 = vmatprep.subr.mxu0 0.0
  %587 = vmatpush1.msra.mxu0 0.0
  %588 = vmatprep.subr.mxu0 0.0
  %589 = vmatpush1.msra.mxu0 0.0
  %590 = vmatprep.subr.mxu0 0.0
  %591 = vmatpush1.msra.mxu0 0.0
  %592 = vmatprep.subr.mxu0 0.0
  %593 = vmatpush1.msra.mxu0 0.0
  %594 = vmatprep.mubr.f32.mxu0 0.0
  %595 = vmatmul.mubr.f32.gmra.mrb[0].mxu0 %v528
  %v596 = vpop.f32.mrb[0].mxu0
  %v597 = vadd.f32 0.0, %v596
  %v598 = vpop.f32.mrb[0].mxu0
  %599 = vdwg.mxu0
  %v600 = vlaneseq
  %v601 = vshrl.u32 %v600, 7
  %v602 = vsub.s32 0, %v601
  %v603 = vrot.slane %v597, %v602
  %v604 = vmul.f32 %v374, %v603
  %v605 = vmul.f32 %v375, %v603
  %v606 = vmul.f32 %v376, %v603
  %v607 = vmul.f32 %v377, %v603
  %v608 = vlaneseq
  %v609 = vshrl.u32 %v608, 7
  %v610 = vsub.s32 1, %v609
  %v611 = vrot.slane %v597, %v610
  %v612 = vadd.f32 %v604, %v611
  %v613 = vadd.f32 %v605, %v611
  %v614 = vadd.f32 %v606, %v611
  %v615 = vadd.f32 %v607, %v611
  %vm616 = vcmp.ge.f32.partialorder %v612, 0.0
  %vm617 = vcmp.ge.f32.partialorder %v613, 0.0
  %vm618 = vcmp.ge.f32.partialorder %v614, 0.0
  %vm619 = vcmp.ge.f32.partialorder %v615, 0.0
  %v620 = vld [vmem:[%s7] sm:$0x1]
  %v622 = vlaneseq
  %v623 = vshrl.u32 %v622, 7
  %v624 = vsub.s32 0, %v623
  %v625 = vrot.slane %v620, %v624
  %v627 = vmul.f32 %v625, %v612
  %v628 = vmul.f32 %v625, %v613
  %v629 = vmul.f32 %v625, %v614
  %v630 = vmul.f32 %v625, %v615
  %v631 = vsel %vm616, %v612, %v627
  %v632 = vsel %vm617, %v613, %v628
  %v633 = vsel %vm618, %v614, %v629
  %v634 = vsel %vm619, %v615, %v630
  %635 = vst [vmem:[#allocation3 + $0x1] sm:$0xff] %v631
  %636 = vst [vmem:[#allocation3 + $0x9] sm:$0xff] %v632
  %637 = vst [vmem:[#allocation3 + $0x19] sm:$0xff] %v633
  %638 = vst [vmem:[#allocation3 + $0x21] sm:$0xff] %v634
  %v639 = vld [vmem:[#allocation3] sm:$0xff]
  %v640 = vld [vmem:[#allocation3 + $0x8] sm:$0xff]
  %v641 = vld [vmem:[#allocation3 + $0x18] sm:$0xff]
  %v642 = vld [vmem:[#allocation3 + $0x20] sm:$0xff]
  %v643 = vpack.c.bf16 %v640, %v639
  %v644 = vpack.c.bf16 %v642, %v641
  %v645 = vld [vmem:[%s8] sm:$0xf]
  %v646 = vld [vmem:[%s8 + $0x4] sm:$0xf]
  %v647 = vld [vmem:[%s8 + $0x8] sm:$0xf]
  %v648 = vld [vmem:[%s8 + $0xc] sm:$0xf]
  %v649 = vld [vmem:[%s8 + $0x10] sm:$0xf]
  %v650 = vld [vmem:[%s8 + $0x14] sm:$0xf]
  %v651 = vld [vmem:[%s8 + $0x18] sm:$0xf]
  %v652 = vld [vmem:[%s8 + $0x1c] sm:$0xf]
  %v653 = vld [vmem:[%s8 + $0x20] sm:$0xf]
  %v654 = vld [vmem:[%s8 + $0x24] sm:$0xf]
  %v655 = vld [vmem:[%s8 + $0x28] sm:$0xf]
  %v656 = vld [vmem:[%s8 + $0x2c] sm:$0xf]
  %v657 = vld [vmem:[%s8 + $0x30] sm:$0xf]
  %v658 = vld [vmem:[%s8 + $0x34] sm:$0xf]
  %v659 = vld [vmem:[%s8 + $0x38] sm:$0xf]
  %v660 = vld [vmem:[%s8 + $0x3c] sm:$0xf]
  %v661 = vld [vmem:[#allocation3 + $0x1] sm:$0xff]
  %v662 = vld [vmem:[#allocation3 + $0x9] sm:$0xff]
  %v663 = vld [vmem:[#allocation3 + $0x19] sm:$0xff]
  %v664 = vld [vmem:[#allocation3 + $0x21] sm:$0xff]
  %v665 = vpack.c.bf16 %v662, %v661
  %v666 = vpack.c.bf16 %v664, %v663
  %s667 = scalar_lea.vmem %s8, 64
  %v668 = vld [vmem:[%s667] sm:$0xf]
  %v669 = vld [vmem:[%s667 + $0x4] sm:$0xf]
  %v670 = vld [vmem:[%s667 + $0x8] sm:$0xf]
  %v671 = vld [vmem:[%s667 + $0xc] sm:$0xf]
  %v672 = vld [vmem:[%s667 + $0x10] sm:$0xf]
  %v673 = vld [vmem:[%s667 + $0x14] sm:$0xf]
  %v674 = vld [vmem:[%s667 + $0x18] sm:$0xf]
  %v675 = vld [vmem:[%s667 + $0x1c] sm:$0xf]
  %v676 = vld [vmem:[%s667 + $0x20] sm:$0xf]
  %v677 = vld [vmem:[%s667 + $0x24] sm:$0xf]
  %v678 = vld [vmem:[%s667 + $0x28] sm:$0xf]
  %v679 = vld [vmem:[%s667 + $0x2c] sm:$0xf]
  %v680 = vld [vmem:[%s667 + $0x30] sm:$0xf]
  %v681 = vld [vmem:[%s667 + $0x34] sm:$0xf]
  %v682 = vld [vmem:[%s667 + $0x38] sm:$0xf]
  %v683 = vld [vmem:[%s667 + $0x3c] sm:$0xf]
  %v700 = vunpack.c.l.b16 %v668
  %v701 = vunpack.c.l.b16 %v669
  %v702 = vunpack.c.l.b16 %v670
  %v703 = vunpack.c.l.b16 %v671
  %v704 = vunpack.c.l.b16 %v672
  %v705 = vunpack.c.l.b16 %v673
  %v706 = vunpack.c.l.b16 %v674
  %v707 = vunpack.c.l.b16 %v675
  %v708 = vunpack.c.l.b16 %v676
  %v709 = vunpack.c.l.b16 %v677
  %v710 = vunpack.c.l.b16 %v678
  %v711 = vunpack.c.l.b16 %v679
  %v712 = vunpack.c.l.b16 %v680
  %v713 = vunpack.c.l.b16 %v681
  %v714 = vunpack.c.l.b16 %v682
  %v715 = vunpack.c.l.b16 %v683
  %v716 = vpack.c.b16 %v701, %v700
  %v717 = vpack.c.b16 %v703, %v702
  %v718 = vpack.c.b16 %v705, %v704
  %v719 = vpack.c.b16 %v707, %v706
  %v720 = vpack.c.b16 %v709, %v708
  %v721 = vpack.c.b16 %v711, %v710
  %v722 = vpack.c.b16 %v713, %v712
  %v723 = vpack.c.b16 %v715, %v714
  %732 = vmatprep.subr.bf16.mxu0 0
  %733 = vmatpush1.bf16.msra.mxu0 %v716
  %734 = vmatprep.subr.bf16.mxu0 0
  %735 = vmatpush1.bf16.msra.mxu0 %v717
  %736 = vmatprep.subr.bf16.mxu0 0
  %737 = vmatpush1.bf16.msra.mxu0 %v718
  %738 = vmatprep.subr.bf16.mxu0 0
  %739 = vmatpush1.bf16.msra.mxu0 %v719
  %740 = vmatprep.subr.bf16.mxu0 0
  %741 = vmatpush1.bf16.msra.mxu0 %v720
  %742 = vmatprep.subr.bf16.mxu0 0
  %743 = vmatpush1.bf16.msra.mxu0 %v721
  %744 = vmatprep.subr.bf16.mxu0 0
  %745 = vmatpush1.bf16.msra.mxu0 %v722
  %746 = vmatprep.subr.bf16.mxu0 0
  %747 = vmatpush1.bf16.msra.mxu0 %v723
  %748 = vmatprep.subr.bf16.mxu0 0
  %749 = vmatpush1.bf16.msra.mxu0 0
  %750 = vmatprep.subr.bf16.mxu0 0
  %751 = vmatpush1.bf16.msra.mxu0 0
  %752 = vmatprep.subr.bf16.mxu0 0
  %753 = vmatpush1.bf16.msra.mxu0 0
  %754 = vmatprep.subr.bf16.mxu0 0
  %755 = vmatpush1.bf16.msra.mxu0 0
  %756 = vmatprep.subr.bf16.mxu0 0
  %757 = vmatpush1.bf16.msra.mxu0 0
  %758 = vmatprep.subr.bf16.mxu0 0
  %759 = vmatpush1.bf16.msra.mxu0 0
  %760 = vmatprep.subr.bf16.mxu0 0
  %761 = vmatpush1.bf16.msra.mxu0 0
  %762 = vmatprep.subr.bf16.mxu0 0
  %763 = vmatpush1.bf16.msra.mxu0 0
  %764 = vmatprep.mubr.bf16.mxu0 0
  %765 = vmatmul.mubr.bf16.gmra.mrb[0].mxu0 %v665
  %v766 = vpop.f32.mrb[0].mxu0
  %v767 = vadd.f32 0.0, %v766
  %v768 = vpop.f32.mrb[0].mxu0
  %v769 = vpop.f32.mrb[0].mxu0
  %v770 = vadd.f32 0.0, %v769
  %v771 = vpop.f32.mrb[0].mxu0
  %772 = vmatprep.mubr.bf16.mxu0 0
  %773 = vmatmul.mubr.bf16.gmra.mrb[0].mxu0 %v666
  %v774 = vpop.f32.mrb[0].mxu0
  %v775 = vadd.f32 0.0, %v774
  %v776 = vpop.f32.mrb[0].mxu0
  %v777 = vpop.f32.mrb[0].mxu0
  %v778 = vadd.f32 0.0, %v777
  %v779 = vpop.f32.mrb[0].mxu0
  %780 = vdwg.mxu0
  %v797 = vunpack.c.l.b16 %v645
  %v798 = vunpack.c.l.b16 %v646
  %v799 = vunpack.c.l.b16 %v647
  %v800 = vunpack.c.l.b16 %v648
  %v801 = vunpack.c.l.b16 %v649
  %v802 = vunpack.c.l.b16 %v650
  %v803 = vunpack.c.l.b16 %v651
  %v804 = vunpack.c.l.b16 %v652
  %v805 = vunpack.c.l.b16 %v653
  %v806 = vunpack.c.l.b16 %v654
  %v807 = vunpack.c.l.b16 %v655
  %v808 = vunpack.c.l.b16 %v656
  %v809 = vunpack.c.l.b16 %v657
  %v810 = vunpack.c.l.b16 %v658
  %v811 = vunpack.c.l.b16 %v659
  %v812 = vunpack.c.l.b16 %v660
  %v813 = vpack.c.b16 %v798, %v797
  %v814 = vpack.c.b16 %v800, %v799
  %v815 = vpack.c.b16 %v802, %v801
  %v816 = vpack.c.b16 %v804, %v803
  %v817 = vpack.c.b16 %v806, %v805
  %v818 = vpack.c.b16 %v808, %v807
  %v819 = vpack.c.b16 %v810, %v809
  %v820 = vpack.c.b16 %v812, %v811
  %829 = vmatprep.subr.bf16.mxu0 0
  %830 = vmatpush1.bf16.msra.mxu0 %v813
  %831 = vmatprep.subr.bf16.mxu0 0
  %832 = vmatpush1.bf16.msra.mxu0 %v814
  %833 = vmatprep.subr.bf16.mxu0 0
  %834 = vmatpush1.bf16.msra.mxu0 %v815
  %835 = vmatprep.subr.bf16.mxu0 0
  %836 = vmatpush1.bf16.msra.mxu0 %v816
  %837 = vmatprep.subr.bf16.mxu0 0
  %838 = vmatpush1.bf16.msra.mxu0 %v817
  %839 = vmatprep.subr.bf16.mxu0 0
  %840 = vmatpush1.bf16.msra.mxu0 %v818
  %841 = vmatprep.subr.bf16.mxu0 0
  %842 = vmatpush1.bf16.msra.mxu0 %v819
  %843 = vmatprep.subr.bf16.mxu0 0
  %844 = vmatpush1.bf16.msra.mxu0 %v820
  %845 = vmatprep.subr.bf16.mxu0 0
  %846 = vmatpush1.bf16.msra.mxu0 0
  %847 = vmatprep.subr.bf16.mxu0 0
  %848 = vmatpush1.bf16.msra.mxu0 0
  %849 = vmatprep.subr.bf16.mxu0 0
  %850 = vmatpush1.bf16.msra.mxu0 0
  %851 = vmatprep.subr.bf16.mxu0 0
  %852 = vmatpush1.bf16.msra.mxu0 0
  %853 = vmatprep.subr.bf16.mxu0 0
  %854 = vmatpush1.bf16.msra.mxu0 0
  %855 = vmatprep.subr.bf16.mxu0 0
  %856 = vmatpush1.bf16.msra.mxu0 0
  %857 = vmatprep.subr.bf16.mxu0 0
  %858 = vmatpush1.bf16.msra.mxu0 0
  %859 = vmatprep.subr.bf16.mxu0 0
  %860 = vmatpush1.bf16.msra.mxu0 0
  %861 = vmatprep.mubr.bf16.mxu0 0
  %862 = vmatmul.mubr.bf16.gmra.mrb[0].mxu0 %v643
  %v863 = vpop.f32.mrb[0].mxu0
  %v864 = vadd.f32 %v767, %v863
  %v865 = vpop.f32.mrb[0].mxu0
  %v866 = vpop.f32.mrb[0].mxu0
  %v867 = vadd.f32 %v770, %v866
  %v868 = vpop.f32.mrb[0].mxu0
  %869 = vmatprep.mubr.bf16.mxu0 0
  %870 = vmatmul.mubr.bf16.gmra.mrb[0].mxu0 %v644
  %v871 = vpop.f32.mrb[0].mxu0
  %v872 = vadd.f32 %v775, %v871
  %v873 = vpop.f32.mrb[0].mxu0
  %v874 = vpop.f32.mrb[0].mxu0
  %v875 = vadd.f32 %v778, %v874
  %v876 = vpop.f32.mrb[0].mxu0
  %877 = vdwg.mxu0
  %v878 = vld [vmem:[#allocation3 + $0x2] sm:$0xff]
  %v879 = vld [vmem:[#allocation3 + $0xa] sm:$0xff]
  %v880 = vld [vmem:[#allocation3 + $0x1a] sm:$0xff]
  %v881 = vld [vmem:[#allocation3 + $0x22] sm:$0xff]
  %v882 = vpack.c.bf16 %v879, %v878
  %v883 = vpack.c.bf16 %v881, %v880
  %s884 = scalar_lea.vmem %s8, 128
  %v885 = vld [vmem:[%s884] sm:$0xf]
  %v886 = vld [vmem:[%s884 + $0x4] sm:$0xf]
  %v887 = vld [vmem:[%s884 + $0x8] sm:$0xf]
  %v888 = vld [vmem:[%s884 + $0xc] sm:$0xf]
  %v889 = vld [vmem:[%s884 + $0x10] sm:$0xf]
  %v890 = vld [vmem:[%s884 + $0x14] sm:$0xf]
  %v891 = vld [vmem:[%s884 + $0x18] sm:$0xf]
  %v892 = vld [vmem:[%s884 + $0x1c] sm:$0xf]
  %v893 = vld [vmem:[%s884 + $0x20] sm:$0xf]
  %v894 = vld [vmem:[%s884 + $0x24] sm:$0xf]
  %v895 = vld [vmem:[%s884 + $0x28] sm:$0xf]
  %v896 = vld [vmem:[%s884 + $0x2c] sm:$0xf]
  %v897 = vld [vmem:[%s884 + $0x30] sm:$0xf]
  %v898 = vld [vmem:[%s884 + $0x34] sm:$0xf]
  %v899 = vld [vmem:[%s884 + $0x38] sm:$0xf]
  %v900 = vld [vmem:[%s884 + $0x3c] sm:$0xf]
  %v917 = vunpack.c.l.b16 %v885
  %v918 = vunpack.c.l.b16 %v886
  %v919 = vunpack.c.l.b16 %v887
  %v920 = vunpack.c.l.b16 %v888
  %v921 = vunpack.c.l.b16 %v889
  %v922 = vunpack.c.l.b16 %v890
  %v923 = vunpack.c.l.b16 %v891
  %v924 = vunpack.c.l.b16 %v892
  %v925 = vunpack.c.l.b16 %v893
  %v926 = vunpack.c.l.b16 %v894
  %v927 = vunpack.c.l.b16 %v895
  %v928 = vunpack.c.l.b16 %v896
  %v929 = vunpack.c.l.b16 %v897
  %v930 = vunpack.c.l.b16 %v898
  %v931 = vunpack.c.l.b16 %v899
  %v932 = vunpack.c.l.b16 %v900
  %v933 = vpack.c.b16 %v918, %v917
  %v934 = vpack.c.b16 %v920, %v919
  %v935 = vpack.c.b16 %v922, %v921
  %v936 = vpack.c.b16 %v924, %v923
  %v937 = vpack.c.b16 %v926, %v925
  %v938 = vpack.c.b16 %v928, %v927
  %v939 = vpack.c.b16 %v930, %v929
  %v940 = vpack.c.b16 %v932, %v931
  %949 = vmatprep.subr.bf16.mxu0 0
  %950 = vmatpush1.bf16.msra.mxu0 %v933
  %951 = vmatprep.subr.bf16.mxu0 0
  %952 = vmatpush1.bf16.msra.mxu0 %v934
  %953 = vmatprep.subr.bf16.mxu0 0
  %954 = vmatpush1.bf16.msra.mxu0 %v935
  %955 = vmatprep.subr.bf16.mxu0 0
  %956 = vmatpush1.bf16.msra.mxu0 %v936
  %957 = vmatprep.subr.bf16.mxu0 0
  %958 = vmatpush1.bf16.msra.mxu0 %v937
  %959 = vmatprep.subr.bf16.mxu0 0
  %960 = vmatpush1.bf16.msra.mxu0 %v938
  %961 = vmatprep.subr.bf16.mxu0 0
  %962 = vmatpush1.bf16.msra.mxu0 %v939
  %963 = vmatprep.subr.bf16.mxu0 0
  %964 = vmatpush1.bf16.msra.mxu0 %v940
  %965 = vmatprep.subr.bf16.mxu0 0
  %966 = vmatpush1.bf16.msra.mxu0 0
  %967 = vmatprep.subr.bf16.mxu0 0
  %968 = vmatpush1.bf16.msra.mxu0 0
  %969 = vmatprep.subr.bf16.mxu0 0
  %970 = vmatpush1.bf16.msra.mxu0 0
  %971 = vmatprep.subr.bf16.mxu0 0
  %972 = vmatpush1.bf16.msra.mxu0 0
  %973 = vmatprep.subr.bf16.mxu0 0
  %974 = vmatpush1.bf16.msra.mxu0 0
  %975 = vmatprep.subr.bf16.mxu0 0
  %976 = vmatpush1.bf16.msra.mxu0 0
  %977 = vmatprep.subr.bf16.mxu0 0
  %978 = vmatpush1.bf16.msra.mxu0 0
  %979 = vmatprep.subr.bf16.mxu0 0
  %980 = vmatpush1.bf16.msra.mxu0 0
  %981 = vmatprep.mubr.bf16.mxu0 0
  %982 = vmatmul.mubr.bf16.gmra.mrb[0].mxu0 %v882
  %v983 = vpop.f32.mrb[0].mxu0
  %v984 = vadd.f32 0.0, %v983
  %v985 = vpop.f32.mrb[0].mxu0
  %v986 = vpop.f32.mrb[0].mxu0
  %v987 = vadd.f32 0.0, %v986
  %v988 = vpop.f32.mrb[0].mxu0
  %989 = vmatprep.mubr.bf16.mxu0 0
  %990 = vmatmul.mubr.bf16.gmra.mrb[0].mxu0 %v883
  %v991 = vpop.f32.mrb[0].mxu0
  %v992 = vadd.f32 0.0, %v991
  %v993 = vpop.f32.mrb[0].mxu0
  %v994 = vpop.f32.mrb[0].mxu0
  %v995 = vadd.f32 0.0, %v994
  %v996 = vpop.f32.mrb[0].mxu0
  %997 = vdwg.mxu0
  %v998 = vadd.f32 %v864, %v984
  %v999 = vadd.f32 %v867, %v987
  %v1000 = vadd.f32 %v872, %v992
  %v1001 = vadd.f32 %v875, %v995
  %v1002 = vld [vmem:[%s9] sm:$0x1]
  %v1004 = vlaneseq
  %v1005 = vshrl.u32 %v1004, 7
  %v1006 = vsub.s32 0, %v1005
  %v1007 = vrot.slane %v1002, %v1006
  %v1009 = vadd.f32 %v998, %v1007
  %v1010 = vadd.f32 %v999, %v1007
  %v1011 = vadd.f32 %v1000, %v1007
  %v1012 = vadd.f32 %v1001, %v1007
  %v1013 = vadd.f32 %v1009, %v1010
  %v1014 = vadd.f32 %v1013, %v1011
  %v1015 = vadd.f32 %v1014, %v1012
  %v1016 = vrot.slane %v1015, 4
  %v1017 = vadd.f32 %v1015, %v1016
  %v1018 = vrot.slane %v1017, 2
  %v1019 = vadd.f32 %v1017, %v1018
  %v1020 = vrot.slane %v1019, 1
  %v1021 = vadd.f32 %v1019, %v1020
  %v1022 = vmul.f32 %v1009, %v1009
  %v1023 = vmul.f32 %v1010, %v1010
  %v1024 = vmul.f32 %v1011, %v1011
  %v1025 = vmul.f32 %v1012, %v1012
  %v1026 = vadd.f32 %v1022, %v1023
  %v1027 = vadd.f32 %v1026, %v1024
  %v1028 = vadd.f32 %v1027, %v1025
  %v1029 = vrot.slane %v1028, 4
  %v1030 = vadd.f32 %v1028, %v1029
  %v1031 = vrot.slane %v1030, 2
  %v1032 = vadd.f32 %v1030, %v1031
  %v1033 = vrot.slane %v1032, 1
  %v1034 = vadd.f32 %v1032, %v1033
  %v1035 = vsel %vm400, %v1021, %v1034
  %v1036 = vld [vmem:[%s1] sm:$0xff]
  %v1037 = vld [vmem:[%s1 + $0x8] sm:$0xff]
  %v1038 = vld [vmem:[%s1 + $0x10] sm:$0xff]
  %v1039 = vld [vmem:[%s1 + $0x18] sm:$0xff]
  %v1040 = vld [vmem:[%s1 + $0x20] sm:$0xff]
  %v1041 = vld [vmem:[%s1 + $0x28] sm:$0xff]
  %v1042 = vld [vmem:[%s1 + $0x30] sm:$0xff]
  %v1043 = vld [vmem:[%s1 + $0x38] sm:$0xff]
  %v1044 = vld [vmem:[%s1 + $0x40] sm:$0xff]
  %v1045 = vld [vmem:[%s1 + $0x48] sm:$0xff]
  %v1046 = vld [vmem:[%s1 + $0x50] sm:$0xff]
  %v1047 = vld [vmem:[%s1 + $0x58] sm:$0xff]
  %v1048 = vld [vmem:[%s1 + $0x60] sm:$0xff]
  %v1049 = vld [vmem:[%s1 + $0x68] sm:$0xff]
  %v1050 = vld [vmem:[%s1 + $0x70] sm:$0xff]
  %v1051 = vld [vmem:[%s1 + $0x78] sm:$0xff]
  %1052 = vmatprep.subr.mxu0 0.0
  %1053 = vmatpush1.msra.mxu0 %v1036
  %1054 = vmatprep.subr.mxu0 0.0
  %1055 = vmatpush1.msra.mxu0 %v1037
  %1056 = vmatprep.subr.mxu0 0.0
  %1057 = vmatpush1.msra.mxu0 %v1038
  %1058 = vmatprep.subr.mxu0 0.0
  %1059 = vmatpush1.msra.mxu0 %v1039
  %1060 = vmatprep.subr.mxu0 0.0
  %1061 = vmatpush1.msra.mxu0 %v1040
  %1062 = vmatprep.subr.mxu0 0.0
  %1063 = vmatpush1.msra.mxu0 %v1041
  %1064 = vmatprep.subr.mxu0 0.0
  %1065 = vmatpush1.msra.mxu0 %v1042
  %1066 = vmatprep.subr.mxu0 0.0
  %1067 = vmatpush1.msra.mxu0 %v1043
  %1068 = vmatprep.subr.mxu0 0.0
  %1069 = vmatpush1.msra.mxu0 %v1044
  %1070 = vmatprep.subr.mxu0 0.0
  %1071 = vmatpush1.msra.mxu0 %v1045
  %1072 = vmatprep.subr.mxu0 0.0
  %1073 = vmatpush1.msra.mxu0 %v1046
  %1074 = vmatprep.subr.mxu0 0.0
  %1075 = vmatpush1.msra.mxu0 %v1047
  %1076 = vmatprep.subr.mxu0 0.0
  %1077 = vmatpush1.msra.mxu0 %v1048
  %1078 = vmatprep.subr.mxu0 0.0
  %1079 = vmatpush1.msra.mxu0 %v1049
  %1080 = vmatprep.subr.mxu0 0.0
  %1081 = vmatpush1.msra.mxu0 %v1050
  %1082 = vmatprep.subr.mxu0 0.0
  %1083 = vmatpush1.msra.mxu0 %v1051
  %1084 = vmatprep.subr.mxu0 0.0
  %1085 = vmatpush1.msra.mxu0 0.0
  %1086 = vmatprep.subr.mxu0 0.0
  %1087 = vmatpush1.msra.mxu0 0.0
  %1088 = vmatprep.subr.mxu0 0.0
  %1089 = vmatpush1.msra.mxu0 0.0
  %1090 = vmatprep.subr.mxu0 0.0
  %1091 = vmatpush1.msra.mxu0 0.0
  %1092 = vmatprep.subr.mxu0 0.0
  %1093 = vmatpush1.msra.mxu0 0.0
  %1094 = vmatprep.subr.mxu0 0.0
  %1095 = vmatpush1.msra.mxu0 0.0
  %1096 = vmatprep.subr.mxu0 0.0
  %1097 = vmatpush1.msra.mxu0 0.0
  %1098 = vmatprep.subr.mxu0 0.0
  %1099 = vmatpush1.msra.mxu0 0.0
  %1100 = vmatprep.subr.mxu0 0.0
  %1101 = vmatpush1.msra.mxu0 0.0
  %1102 = vmatprep.subr.mxu0 0.0
  %1103 = vmatpush1.msra.mxu0 0.0
  %1104 = vmatprep.subr.mxu0 0.0
  %1105 = vmatpush1.msra.mxu0 0.0
  %1106 = vmatprep.subr.mxu0 0.0
  %1107 = vmatpush1.msra.mxu0 0.0
  %1108 = vmatprep.subr.mxu0 0.0
  %1109 = vmatpush1.msra.mxu0 0.0
  %1110 = vmatprep.subr.mxu0 0.0
  %1111 = vmatpush1.msra.mxu0 0.0
  %1112 = vmatprep.subr.mxu0 0.0
  %1113 = vmatpush1.msra.mxu0 0.0
  %1114 = vmatprep.subr.mxu0 0.0
  %1115 = vmatpush1.msra.mxu0 0.0
  %1116 = vmatprep.mubr.f32.mxu0 0.0
  %1117 = vmatmul.mubr.f32.gmra.mrb[0].mxu0 %v1035
  %v1118 = vpop.f32.mrb[0].mxu0
  %v1119 = vadd.f32 0.0, %v1118
  %v1120 = vpop.f32.mrb[0].mxu0
  %1121 = vdwg.mxu0
  %v1122 = vmul.f32 %v1119, 0.001953125
  %v1123 = vmul.f32 %v1122, %v1122
  %v1125 = vrot.slane %v1123, 7
  %v1127 = vsub.f32 %v1122, %v1125
  %v1128 = vld [vmem:[%s10] sm:$0x1]
  %v1129 = vadd.f32 %v1127, 1e-05
  %v1130 = vrsqrt.pop %v1129
  %v1133 = vunpack.c.l.s4 1966171168
  %v1134 = vunpack.c.0.s8 %v1133
  %v1135 = vlaneseq
  %v1136 = vshrl.u32 %v1135, 7
  %v1137 = vsub.s32 %v1134, %v1136
  %v1138 = vrot.slane %v1130, %v1137
  %v1139 = vcombine.high %v1138, %v1138
  %v1141 = vunpack.c.l.s4 1966171168
  %v1142 = vunpack.c.0.s8 %v1141
  %v1143 = vlaneseq
  %v1144 = vshrl.u32 %v1143, 7
  %v1145 = vsub.s32 %v1142, %v1144
  %v1146 = vrot.slane %v1139, %v1145
  %v1148 = vmul.f32 %v1128, %v1146
  %v1149 = vld [vmem:[%s11] sm:$0x1]
  %v1150 = vmul.f32 %v1122, %v1148
  %v1151 = vsub.f32 %v1149, %v1150
  %v1153 = vlaneseq
  %v1154 = vshrl.u32 %v1153, 7
  %v1155 = vsub.s32 0, %v1154
  %v1156 = vrot.slane %v1151, %v1155
  %v1158 = vsel %vm400, %v1148, %v1156
  %v1159 = vld [vmem:[%s2] sm:$0xff]
  %v1161 = vsel %vm526, %v1158, 0
  %1163 = vmatprep.subr.mxu0 0.0
  %1164 = vmatpush1.msra.mxu0 %v1159
  %1165 = vmatprep.subr.mxu0 0.0
  %1166 = vmatpush1.msra.mxu0 0.0
  %1167 = vmatprep.subr.mxu0 0.0
  %1168 = vmatpush1.msra.mxu0 0.0
  %1169 = vmatprep.subr.mxu0 0.0
  %1170 = vmatpush1.msra.mxu0 0.0
  %1171 = vmatprep.subr.mxu0 0.0
  %1172 = vmatpush1.msra.mxu0 0.0
  %1173 = vmatprep.subr.mxu0 0.0
  %1174 = vmatpush1.msra.mxu0 0.0
  %1175 = vmatprep.subr.mxu0 0.0
  %1176 = vmatpush1.msra.mxu0 0.0
  %1177 = vmatprep.subr.mxu0 0.0
  %1178 = vmatpush1.msra.mxu0 0.0
  %1179 = vmatprep.subr.mxu0 0.0
  %1180 = vmatpush1.msra.mxu0 0.0
  %1181 = vmatprep.subr.mxu0 0.0
  %1182 = vmatpush1.msra.mxu0 0.0
  %1183 = vmatprep.subr.mxu0 0.0
  %1184 = vmatpush1.msra.mxu0 0.0
  %1185 = vmatprep.subr.mxu0 0.0
  %1186 = vmatpush1.msra.mxu0 0.0
  %1187 = vmatprep.subr.mxu0 0.0
  %1188 = vmatpush1.msra.mxu0 0.0
  %1189 = vmatprep.subr.mxu0 0.0
  %1190 = vmatpush1.msra.mxu0 0.0
  %1191 = vmatprep.subr.mxu0 0.0
  %1192 = vmatpush1.msra.mxu0 0.0
  %1193 = vmatprep.subr.mxu0 0.0
  %1194 = vmatpush1.msra.mxu0 0.0
  %1195 = vmatprep.subr.mxu0 0.0
  %1196 = vmatpush1.msra.mxu0 0.0
  %1197 = vmatprep.subr.mxu0 0.0
  %1198 = vmatpush1.msra.mxu0 0.0
  %1199 = vmatprep.subr.mxu0 0.0
  %1200 = vmatpush1.msra.mxu0 0.0
  %1201 = vmatprep.subr.mxu0 0.0
  %1202 = vmatpush1.msra.mxu0 0.0
  %1203 = vmatprep.subr.mxu0 0.0
  %1204 = vmatpush1.msra.mxu0 0.0
  %1205 = vmatprep.subr.mxu0 0.0
  %1206 = vmatpush1.msra.mxu0 0.0
  %1207 = vmatprep.subr.mxu0 0.0
  %1208 = vmatpush1.msra.mxu0 0.0
  %1209 = vmatprep.subr.mxu0 0.0
  %1210 = vmatpush1.msra.mxu0 0.0
  %1211 = vmatprep.subr.mxu0 0.0
  %1212 = vmatpush1.msra.mxu0 0.0
  %1213 = vmatprep.subr.mxu0 0.0
  %1214 = vmatpush1.msra.mxu0 0.0
  %1215 = vmatprep.subr.mxu0 0.0
  %1216 = vmatpush1.msra.mxu0 0.0
  %1217 = vmatprep.subr.mxu0 0.0
  %1218 = vmatpush1.msra.mxu0 0.0
  %1219 = vmatprep.subr.mxu0 0.0
  %1220 = vmatpush1.msra.mxu0 0.0
  %1221 = vmatprep.subr.mxu0 0.0
  %1222 = vmatpush1.msra.mxu0 0.0
  %1223 = vmatprep.subr.mxu0 0.0
  %1224 = vmatpush1.msra.mxu0 0.0
  %1225 = vmatprep.subr.mxu0 0.0
  %1226 = vmatpush1.msra.mxu0 0.0
  %1227 = vmatprep.mubr.f32.mxu0 0.0
  %1228 = vmatmul.mubr.f32.gmra.mrb[0].mxu0 %v1161
  %v1229 = vpop.f32.mrb[0].mxu0
  %v1230 = vadd.f32 0.0, %v1229
  %v1231 = vpop.f32.mrb[0].mxu0
  %1232 = vdwg.mxu0
  %v1233 = vlaneseq
  %v1234 = vshrl.u32 %v1233, 7
  %v1235 = vsub.s32 0, %v1234
  %v1236 = vrot.slane %v1230, %v1235
  %v1237 = vmul.f32 %v1009, %v1236
  %v1238 = vmul.f32 %v1010, %v1236
  %v1239 = vmul.f32 %v1011, %v1236
  %v1240 = vmul.f32 %v1012, %v1236
  %v1241 = vlaneseq
  %v1242 = vshrl.u32 %v1241, 7
  %v1243 = vsub.s32 1, %v1242
  %v1244 = vrot.slane %v1230, %v1243
  %v1245 = vadd.f32 %v1237, %v1244
  %v1246 = vadd.f32 %v1238, %v1244
  %v1247 = vadd.f32 %v1239, %v1244
  %v1248 = vadd.f32 %v1240, %v1244
  %vm1249 = vcmp.ge.f32.partialorder %v1245, 0.0
  %vm1250 = vcmp.ge.f32.partialorder %v1246, 0.0
  %vm1251 = vcmp.ge.f32.partialorder %v1247, 0.0
  %vm1252 = vcmp.ge.f32.partialorder %v1248, 0.0
  %v1253 = vld [vmem:[%s12] sm:$0x1]
  %v1255 = vlaneseq
  %v1256 = vshrl.u32 %v1255, 7
  %v1257 = vsub.s32 0, %v1256
  %v1258 = vrot.slane %v1253, %v1257
  %v1260 = vmul.f32 %v1258, %v1245
  %v1261 = vmul.f32 %v1258, %v1246
  %v1262 = vmul.f32 %v1258, %v1247
  %v1263 = vmul.f32 %v1258, %v1248
  %v1264 = vsel %vm1249, %v1245, %v1260
  %v1265 = vsel %vm1250, %v1246, %v1261
  %v1266 = vsel %vm1251, %v1247, %v1262
  %v1267 = vsel %vm1252, %v1248, %v1263
  %1268 = vst [vmem:[#allocation3 + $0x1] sm:$0xff] %v1264
  %1269 = vst [vmem:[#allocation3 + $0x9] sm:$0xff] %v1265
  %1270 = vst [vmem:[#allocation3 + $0x19] sm:$0xff] %v1266
  %1271 = vst [vmem:[#allocation3 + $0x21] sm:$0xff] %v1267
  %v1272 = vld [vmem:[#allocation3] sm:$0xff]
  %v1273 = vld [vmem:[#allocation3 + $0x8] sm:$0xff]
  %v1274 = vld [vmem:[#allocation3 + $0x18] sm:$0xff]
  %v1275 = vld [vmem:[#allocation3 + $0x20] sm:$0xff]
  %v1276 = vpack.c.bf16 %v1273, %v1272
  %v1277 = vpack.c.bf16 %v1275, %v1274
  %v1278 = vld [vmem:[%s13] sm:$0xf]
  %v1279 = vld [vmem:[%s13 + $0x4] sm:$0xf]
  %v1280 = vld [vmem:[%s13 + $0x8] sm:$0xf]
  %v1281 = vld [vmem:[%s13 + $0xc] sm:$0xf]
  %v1282 = vld [vmem:[%s13 + $0x10] sm:$0xf]
  %v1283 = vld [vmem:[%s13 + $0x14] sm:$0xf]
  %v1284 = vld [vmem:[%s13 + $0x18] sm:$0xf]
  %v1285 = vld [vmem:[%s13 + $0x1c] sm:$0xf]
  %v1286 = vld [vmem:[%s13 + $0x20] sm:$0xf]
  %v1287 = vld [vmem:[%s13 + $0x24] sm:$0xf]
  %v1288 = vld [vmem:[%s13 + $0x28] sm:$0xf]
  %v1289 = vld [vmem:[%s13 + $0x2c] sm:$0xf]
  %v1290 = vld [vmem:[%s13 + $0x30] sm:$0xf]
  %v1291 = vld [vmem:[%s13 + $0x34] sm:$0xf]
  %v1292 = vld [vmem:[%s13 + $0x38] sm:$0xf]
  %v1293 = vld [vmem:[%s13 + $0x3c] sm:$0xf]
  %v1294 = vld [vmem:[#allocation3 + $0x1] sm:$0xff]
  %v1295 = vld [vmem:[#allocation3 + $0x9] sm:$0xff]
  %v1296 = vld [vmem:[#allocation3 + $0x19] sm:$0xff]
  %v1297 = vld [vmem:[#allocation3 + $0x21] sm:$0xff]
  %v1298 = vpack.c.bf16 %v1295, %v1294
  %v1299 = vpack.c.bf16 %v1297, %v1296
  %s1300 = scalar_lea.vmem %s13, 64
  %v1301 = vld [vmem:[%s1300] sm:$0xf]
  %v1302 = vld [vmem:[%s1300 + $0x4] sm:$0xf]
  %v1303 = vld [vmem:[%s1300 + $0x8] sm:$0xf]
  %v1304 = vld [vmem:[%s1300 + $0xc] sm:$0xf]
  %v1305 = vld [vmem:[%s1300 + $0x10] sm:$0xf]
  %v1306 = vld [vmem:[%s1300 + $0x14] sm:$0xf]
  %v1307 = vld [vmem:[%s1300 + $0x18] sm:$0xf]
  %v1308 = vld [vmem:[%s1300 + $0x1c] sm:$0xf]
  %v1309 = vld [vmem:[%s1300 + $0x20] sm:$0xf]
  %v1310 = vld [vmem:[%s1300 + $0x24] sm:$0xf]
  %v1311 = vld [vmem:[%s1300 + $0x28] sm:$0xf]
  %v1312 = vld [vmem:[%s1300 + $0x2c] sm:$0xf]
  %v1313 = vld [vmem:[%s1300 + $0x30] sm:$0xf]
  %v1314 = vld [vmem:[%s1300 + $0x34] sm:$0xf]
  %v1315 = vld [vmem:[%s1300 + $0x38] sm:$0xf]
  %v1316 = vld [vmem:[%s1300 + $0x3c] sm:$0xf]
  %v1333 = vunpack.c.l.b16 %v1301
  %v1334 = vunpack.c.l.b16 %v1302
  %v1335 = vunpack.c.l.b16 %v1303
  %v1336 = vunpack.c.l.b16 %v1304
  %v1337 = vunpack.c.l.b16 %v1305
  %v1338 = vunpack.c.l.b16 %v1306
  %v1339 = vunpack.c.l.b16 %v1307
  %v1340 = vunpack.c.l.b16 %v1308
  %v1341 = vunpack.c.l.b16 %v1309
  %v1342 = vunpack.c.l.b16 %v1310
  %v1343 = vunpack.c.l.b16 %v1311
  %v1344 = vunpack.c.l.b16 %v1312
  %v1345 = vunpack.c.l.b16 %v1313
  %v1346 = vunpack.c.l.b16 %v1314
  %v1347 = vunpack.c.l.b16 %v1315
  %v1348 = vunpack.c.l.b16 %v1316
  %v1349 = vpack.c.b16 %v1334, %v1333
  %v1350 = vpack.c.b16 %v1336, %v1335
  %v1351 = vpack.c.b16 %v1338, %v1337
  %v1352 = vpack.c.b16 %v1340, %v1339
  %v1353 = vpack.c.b16 %v1342, %v1341
  %v1354 = vpack.c.b16 %v1344, %v1343
  %v1355 = vpack.c.b16 %v1346, %v1345
  %v1356 = vpack.c.b16 %v1348, %v1347
  %1365 = vmatprep.subr.bf16.mxu0 0
  %1366 = vmatpush1.bf16.msra.mxu0 %v1349
  %1367 = vmatprep.subr.bf16.mxu0 0
  %1368 = vmatpush1.bf16.msra.mxu0 %v1350
  %1369 = vmatprep.subr.bf16.mxu0 0
  %1370 = vmatpush1.bf16.msra.mxu0 %v1351
  %1371 = vmatprep.subr.bf16.mxu0 0
  %1372 = vmatpush1.bf16.msra.mxu0 %v1352
  %1373 = vmatprep.subr.bf16.mxu0 0
  %1374 = vmatpush1.bf16.msra.mxu0 %v1353
  %1375 = vmatprep.subr.bf16.mxu0 0
  %1376 = vmatpush1.bf16.msra.mxu0 %v1354
  %1377 = vmatprep.subr.bf16.mxu0 0
  %1378 = vmatpush1.bf16.msra.mxu0 %v1355
  %1379 = vmatprep.subr.bf16.mxu0 0
  %1380 = vmatpush1.bf16.msra.mxu0 %v1356
  %1381 = vmatprep.subr.bf16.mxu0 0
  %1382 = vmatpush1.bf16.msra.mxu0 0
  %1383 = vmatprep.subr.bf16.mxu0 0
  %1384 = vmatpush1.bf16.msra.mxu0 0
  %1385 = vmatprep.subr.bf16.mxu0 0
  %1386 = vmatpush1.bf16.msra.mxu0 0
  %1387 = vmatprep.subr.bf16.mxu0 0
  %1388 = vmatpush1.bf16.msra.mxu0 0
  %1389 = vmatprep.subr.bf16.mxu0 0
  %1390 = vmatpush1.bf16.msra.mxu0 0
  %1391 = vmatprep.subr.bf16.mxu0 0
  %1392 = vmatpush1.bf16.msra.mxu0 0
  %1393 = vmatprep.subr.bf16.mxu0 0
  %1394 = vmatpush1.bf16.msra.mxu0 0
  %1395 = vmatprep.subr.bf16.mxu0 0
  %1396 = vmatpush1.bf16.msra.mxu0 0
  %1397 = vmatprep.mubr.bf16.mxu0 0
  %1398 = vmatmul.mubr.bf16.gmra.mrb[0].mxu0 %v1298
  %v1399 = vpop.f32.mrb[0].mxu0
  %v1400 = vadd.f32 0.0, %v1399
  %v1401 = vpop.f32.mrb[0].mxu0
  %v1402 = vpop.f32.mrb[0].mxu0
  %v1403 = vadd.f32 0.0, %v1402
  %v1404 = vpop.f32.mrb[0].mxu0
  %1405 = vmatprep.mubr.bf16.mxu0 0
  %1406 = vmatmul.mubr.bf16.gmra.mrb[0].mxu0 %v1299
  %v1407 = vpop.f32.mrb[0].mxu0
  %v1408 = vadd.f32 0.0, %v1407
  %v1409 = vpop.f32.mrb[0].mxu0
  %v1410 = vpop.f32.mrb[0].mxu0
  %v1411 = vadd.f32 0.0, %v1410
  %v1412 = vpop.f32.mrb[0].mxu0
  %1413 = vdwg.mxu0
  %v1430 = vunpack.c.l.b16 %v1278
  %v1431 = vunpack.c.l.b16 %v1279
  %v1432 = vunpack.c.l.b16 %v1280
  %v1433 = vunpack.c.l.b16 %v1281
  %v1434 = vunpack.c.l.b16 %v1282
  %v1435 = vunpack.c.l.b16 %v1283
  %v1436 = vunpack.c.l.b16 %v1284
  %v1437 = vunpack.c.l.b16 %v1285
  %v1438 = vunpack.c.l.b16 %v1286
  %v1439 = vunpack.c.l.b16 %v1287
  %v1440 = vunpack.c.l.b16 %v1288
  %v1441 = vunpack.c.l.b16 %v1289
  %v1442 = vunpack.c.l.b16 %v1290
  %v1443 = vunpack.c.l.b16 %v1291
  %v1444 = vunpack.c.l.b16 %v1292
  %v1445 = vunpack.c.l.b16 %v1293
  %v1446 = vpack.c.b16 %v1431, %v1430
  %v1447 = vpack.c.b16 %v1433, %v1432
  %v1448 = vpack.c.b16 %v1435, %v1434
  %v1449 = vpack.c.b16 %v1437, %v1436
  %v1450 = vpack.c.b16 %v1439, %v1438
  %v1451 = vpack.c.b16 %v1441, %v1440
  %v1452 = vpack.c.b16 %v1443, %v1442
  %v1453 = vpack.c.b16 %v1445, %v1444
  %1462 = vmatprep.subr.bf16.mxu0 0
  %1463 = vmatpush1.bf16.msra.mxu0 %v1446
  %1464 = vmatprep.subr.bf16.mxu0 0
  %1465 = vmatpush1.bf16.msra.mxu0 %v1447
  %1466 = vmatprep.subr.bf16.mxu0 0
  %1467 = vmatpush1.bf16.msra.mxu0 %v1448
  %1468 = vmatprep.subr.bf16.mxu0 0
  %1469 = vmatpush1.bf16.msra.mxu0 %v1449
  %1470 = vmatprep.subr.bf16.mxu0 0
  %1471 = vmatpush1.bf16.msra.mxu0 %v1450
  %1472 = vmatprep.subr.bf16.mxu0 0
  %1473 = vmatpush1.bf16.msra.mxu0 %v1451
  %1474 = vmatprep.subr.bf16.mxu0 0
  %1475 = vmatpush1.bf16.msra.mxu0 %v1452
  %1476 = vmatprep.subr.bf16.mxu0 0
  %1477 = vmatpush1.bf16.msra.mxu0 %v1453
  %1478 = vmatprep.subr.bf16.mxu0 0
  %1479 = vmatpush1.bf16.msra.mxu0 0
  %1480 = vmatprep.subr.bf16.mxu0 0
  %1481 = vmatpush1.bf16.msra.mxu0 0
  %1482 = vmatprep.subr.bf16.mxu0 0
  %1483 = vmatpush1.bf16.msra.mxu0 0
  %1484 = vmatprep.subr.bf16.mxu0 0
  %1485 = vmatpush1.bf16.msra.mxu0 0
  %1486 = vmatprep.subr.bf16.mxu0 0
  %1487 = vmatpush1.bf16.msra.mxu0 0
  %1488 = vmatprep.subr.bf16.mxu0 0
  %1489 = vmatpush1.bf16.msra.mxu0 0
  %1490 = vmatprep.subr.bf16.mxu0 0
  %1491 = vmatpush1.bf16.msra.mxu0 0
  %1492 = vmatprep.subr.bf16.mxu0 0
  %1493 = vmatpush1.bf16.msra.mxu0 0
  %1494 = vmatprep.mubr.bf16.mxu0 0
  %1495 = vmatmul.mubr.bf16.gmra.mrb[0].mxu0 %v1276
  %v1496 = vpop.f32.mrb[0].mxu0
  %v1497 = vadd.f32 %v1400, %v1496
  %v1498 = vpop.f32.mrb[0].mxu0
  %v1499 = vpop.f32.mrb[0].mxu0
  %v1500 = vadd.f32 %v1403, %v1499
  %v1501 = vpop.f32.mrb[0].mxu0
  %1502 = vmatprep.mubr.bf16.mxu0 0
  %1503 = vmatmul.mubr.bf16.gmra.mrb[0].mxu0 %v1277
  %v1504 = vpop.f32.mrb[0].mxu0
  %v1505 = vadd.f32 %v1408, %v1504
  %v1506 = vpop.f32.mrb[0].mxu0
  %v1507 = vpop.f32.mrb[0].mxu0
  %v1508 = vadd.f32 %v1411, %v1507
  %v1509 = vpop.f32.mrb[0].mxu0
  %1510 = vdwg.mxu0
  %v1511 = vld [vmem:[#allocation3 + $0x2] sm:$0xff]
  %v1512 = vld [vmem:[#allocation3 + $0xa] sm:$0xff]
  %v1513 = vld [vmem:[#allocation3 + $0x1a] sm:$0xff]
  %v1514 = vld [vmem:[#allocation3 + $0x22] sm:$0xff]
  %v1515 = vpack.c.bf16 %v1512, %v1511
  %v1516 = vpack.c.bf16 %v1514, %v1513
  %s1517 = scalar_lea.vmem %s13, 128
  %v1518 = vld [vmem:[%s1517] sm:$0xf]
  %v1519 = vld [vmem:[%s1517 + $0x4] sm:$0xf]
  %v1520 = vld [vmem:[%s1517 + $0x8] sm:$0xf]
  %v1521 = vld [vmem:[%s1517 + $0xc] sm:$0xf]
  %v1522 = vld [vmem:[%s1517 + $0x10] sm:$0xf]
  %v1523 = vld [vmem:[%s1517 + $0x14] sm:$0xf]
  %v1524 = vld [vmem:[%s1517 + $0x18] sm:$0xf]
  %v1525 = vld [vmem:[%s1517 + $0x1c] sm:$0xf]
  %v1526 = vld [vmem:[%s1517 + $0x20] sm:$0xf]
  %v1527 = vld [vmem:[%s1517 + $0x24] sm:$0xf]
  %v1528 = vld [vmem:[%s1517 + $0x28] sm:$0xf]
  %v1529 = vld [vmem:[%s1517 + $0x2c] sm:$0xf]
  %v1530 = vld [vmem:[%s1517 + $0x30] sm:$0xf]
  %v1531 = vld [vmem:[%s1517 + $0x34] sm:$0xf]
  %v1532 = vld [vmem:[%s1517 + $0x38] sm:$0xf]
  %v1533 = vld [vmem:[%s1517 + $0x3c] sm:$0xf]
  %v1550 = vunpack.c.l.b16 %v1518
  %v1551 = vunpack.c.l.b16 %v1519
  %v1552 = vunpack.c.l.b16 %v1520
  %v1553 = vunpack.c.l.b16 %v1521
  %v1554 = vunpack.c.l.b16 %v1522
  %v1555 = vunpack.c.l.b16 %v1523
  %v1556 = vunpack.c.l.b16 %v1524
  %v1557 = vunpack.c.l.b16 %v1525
  %v1558 = vunpack.c.l.b16 %v1526
  %v1559 = vunpack.c.l.b16 %v1527
  %v1560 = vunpack.c.l.b16 %v1528
  %v1561 = vunpack.c.l.b16 %v1529
  %v1562 = vunpack.c.l.b16 %v1530
  %v1563 = vunpack.c.l.b16 %v1531
  %v1564 = vunpack.c.l.b16 %v1532
  %v1565 = vunpack.c.l.b16 %v1533
  %v1566 = vpack.c.b16 %v1551, %v1550
  %v1567 = vpack.c.b16 %v1553, %v1552
  %v1568 = vpack.c.b16 %v1555, %v1554
  %v1569 = vpack.c.b16 %v1557, %v1556
  %v1570 = vpack.c.b16 %v1559, %v1558
  %v1571 = vpack.c.b16 %v1561, %v1560
  %v1572 = vpack.c.b16 %v1563, %v1562
  %v1573 = vpack.c.b16 %v1565, %v1564
  %1582 = vmatprep.subr.bf16.mxu0 0
  %1583 = vmatpush1.bf16.msra.mxu0 %v1566
  %1584 = vmatprep.subr.bf16.mxu0 0
  %1585 = vmatpush1.bf16.msra.mxu0 %v1567
  %1586 = vmatprep.subr.bf16.mxu0 0
  %1587 = vmatpush1.bf16.msra.mxu0 %v1568
  %1588 = vmatprep.subr.bf16.mxu0 0
  %1589 = vmatpush1.bf16.msra.mxu0 %v1569
  %1590 = vmatprep.subr.bf16.mxu0 0
  %1591 = vmatpush1.bf16.msra.mxu0 %v1570
  %1592 = vmatprep.subr.bf16.mxu0 0
  %1593 = vmatpush1.bf16.msra.mxu0 %v1571
  %1594 = vmatprep.subr.bf16.mxu0 0
  %1595 = vmatpush1.bf16.msra.mxu0 %v1572
  %1596 = vmatprep.subr.bf16.mxu0 0
  %1597 = vmatpush1.bf16.msra.mxu0 %v1573
  %1598 = vmatprep.subr.bf16.mxu0 0
  %1599 = vmatpush1.bf16.msra.mxu0 0
  %1600 = vmatprep.subr.bf16.mxu0 0
  %1601 = vmatpush1.bf16.msra.mxu0 0
  %1602 = vmatprep.subr.bf16.mxu0 0
  %1603 = vmatpush1.bf16.msra.mxu0 0
  %1604 = vmatprep.subr.bf16.mxu0 0
  %1605 = vmatpush1.bf16.msra.mxu0 0
  %1606 = vmatprep.subr.bf16.mxu0 0
  %1607 = vmatpush1.bf16.msra.mxu0 0
  %1608 = vmatprep.subr.bf16.mxu0 0
  %1609 = vmatpush1.bf16.msra.mxu0 0
  %1610 = vmatprep.subr.bf16.mxu0 0
  %1611 = vmatpush1.bf16.msra.mxu0 0
  %1612 = vmatprep.subr.bf16.mxu0 0
  %1613 = vmatpush1.bf16.msra.mxu0 0
  %1614 = vmatprep.mubr.bf16.mxu0 0
  %1615 = vmatmul.mubr.bf16.gmra.mrb[0].mxu0 %v1515
  %v1616 = vpop.f32.mrb[0].mxu0
  %v1617 = vadd.f32 0.0, %v1616
  %v1618 = vpop.f32.mrb[0].mxu0
  %v1619 = vpop.f32.mrb[0].mxu0
  %v1620 = vadd.f32 0.0, %v1619
  %v1621 = vpop.f32.mrb[0].mxu0
  %1622 = vmatprep.mubr.bf16.mxu0 0
  %1623 = vmatmul.mubr.bf16.gmra.mrb[0].mxu0 %v1516
  %v1624 = vpop.f32.mrb[0].mxu0
  %v1625 = vadd.f32 0.0, %v1624
  %v1626 = vpop.f32.mrb[0].mxu0
  %v1627 = vpop.f32.mrb[0].mxu0
  %v1628 = vadd.f32 0.0, %v1627
  %v1629 = vpop.f32.mrb[0].mxu0
  %1630 = vdwg.mxu0
  %v1631 = vadd.f32 %v1497, %v1617
  %v1632 = vadd.f32 %v1500, %v1620
  %v1633 = vadd.f32 %v1505, %v1625
  %v1634 = vadd.f32 %v1508, %v1628
  %v1635 = vld [vmem:[%s14] sm:$0x1]
  %v1637 = vlaneseq
  %v1638 = vshrl.u32 %v1637, 7
  %v1639 = vsub.s32 0, %v1638
  %v1640 = vrot.slane %v1635, %v1639
  %v1642 = vadd.f32 %v1631, %v1640
  %v1643 = vadd.f32 %v1632, %v1640
  %v1644 = vadd.f32 %v1633, %v1640
  %v1645 = vadd.f32 %v1634, %v1640
  %v1646 = vadd.f32 %v1642, %v1643
  %v1647 = vadd.f32 %v1646, %v1644
  %v1648 = vadd.f32 %v1647, %v1645
  %v1649 = vrot.slane %v1648, 4
  %v1650 = vadd.f32 %v1648, %v1649
  %v1651 = vrot.slane %v1650, 2
  %v1652 = vadd.f32 %v1650, %v1651
  %v1653 = vrot.slane %v1652, 1
  %v1654 = vadd.f32 %v1652, %v1653
  %v1655 = vmul.f32 %v1642, %v1642
  %v1656 = vmul.f32 %v1643, %v1643
  %v1657 = vmul.f32 %v1644, %v1644
  %v1658 = vmul.f32 %v1645, %v1645
  %v1659 = vadd.f32 %v1655, %v1656
  %v1660 = vadd.f32 %v1659, %v1657
  %v1661 = vadd.f32 %v1660, %v1658
  %v1662 = vrot.slane %v1661, 4
  %v1663 = vadd.f32 %v1661, %v1662
  %v1664 = vrot.slane %v1663, 2
  %v1665 = vadd.f32 %v1663, %v1664
  %v1666 = vrot.slane %v1665, 1
  %v1667 = vadd.f32 %v1665, %v1666
  %v1668 = vsel %vm400, %v1654, %v1667
  %v1669 = vld [vmem:[%s1] sm:$0xff]
  %v1670 = vld [vmem:[%s1 + $0x8] sm:$0xff]
  %v1671 = vld [vmem:[%s1 + $0x10] sm:$0xff]
  %v1672 = vld [vmem:[%s1 + $0x18] sm:$0xff]
  %v1673 = vld [vmem:[%s1 + $0x20] sm:$0xff]
  %v1674 = vld [vmem:[%s1 + $0x28] sm:$0xff]
  %v1675 = vld [vmem:[%s1 + $0x30] sm:$0xff]
  %v1676 = vld [vmem:[%s1 + $0x38] sm:$0xff]
  %v1677 = vld [vmem:[%s1 + $0x40] sm:$0xff]
  %v1678 = vld [vmem:[%s1 + $0x48] sm:$0xff]
  %v1679 = vld [vmem:[%s1 + $0x50] sm:$0xff]
  %v1680 = vld [vmem:[%s1 + $0x58] sm:$0xff]
  %v1681 = vld [vmem:[%s1 + $0x60] sm:$0xff]
  %v1682 = vld [vmem:[%s1 + $0x68] sm:$0xff]
  %v1683 = vld [vmem:[%s1 + $0x70] sm:$0xff]
  %v1684 = vld [vmem:[%s1 + $0x78] sm:$0xff]
  %1685 = vmatprep.subr.mxu0 0.0
  %1686 = vmatpush1.msra.mxu0 %v1669
  %1687 = vmatprep.subr.mxu0 0.0
  %1688 = vmatpush1.msra.mxu0 %v1670
  %1689 = vmatprep.subr.mxu0 0.0
  %1690 = vmatpush1.msra.mxu0 %v1671
  %1691 = vmatprep.subr.mxu0 0.0
  %1692 = vmatpush1.msra.mxu0 %v1672
  %1693 = vmatprep.subr.mxu0 0.0
  %1694 = vmatpush1.msra.mxu0 %v1673
  %1695 = vmatprep.subr.mxu0 0.0
  %1696 = vmatpush1.msra.mxu0 %v1674
  %1697 = vmatprep.subr.mxu0 0.0
  %1698 = vmatpush1.msra.mxu0 %v1675
  %1699 = vmatprep.subr.mxu0 0.0
  %1700 = vmatpush1.msra.mxu0 %v1676
  %1701 = vmatprep.subr.mxu0 0.0
  %1702 = vmatpush1.msra.mxu0 %v1677
  %1703 = vmatprep.subr.mxu0 0.0
  %1704 = vmatpush1.msra.mxu0 %v1678
  %1705 = vmatprep.subr.mxu0 0.0
  %1706 = vmatpush1.msra.mxu0 %v1679
  %1707 = vmatprep.subr.mxu0 0.0
  %1708 = vmatpush1.msra.mxu0 %v1680
  %1709 = vmatprep.subr.mxu0 0.0
  %1710 = vmatpush1.msra.mxu0 %v1681
  %1711 = vmatprep.subr.mxu0 0.0
  %1712 = vmatpush1.msra.mxu0 %v1682
  %1713 = vmatprep.subr.mxu0 0.0
  %1714 = vmatpush1.msra.mxu0 %v1683
  %1715 = vmatprep.subr.mxu0 0.0
  %1716 = vmatpush1.msra.mxu0 %v1684
  %1717 = vmatprep.subr.mxu0 0.0
  %1718 = vmatpush1.msra.mxu0 0.0
  %1719 = vmatprep.subr.mxu0 0.0
  %1720 = vmatpush1.msra.mxu0 0.0
  %1721 = vmatprep.subr.mxu0 0.0
  %1722 = vmatpush1.msra.mxu0 0.0
  %1723 = vmatprep.subr.mxu0 0.0
  %1724 = vmatpush1.msra.mxu0 0.0
  %1725 = vmatprep.subr.mxu0 0.0
  %1726 = vmatpush1.msra.mxu0 0.0
  %1727 = vmatprep.subr.mxu0 0.0
  %1728 = vmatpush1.msra.mxu0 0.0
  %1729 = vmatprep.subr.mxu0 0.0
  %1730 = vmatpush1.msra.mxu0 0.0
  %1731 = vmatprep.subr.mxu0 0.0
  %1732 = vmatpush1.msra.mxu0 0.0
  %1733 = vmatprep.subr.mxu0 0.0
  %1734 = vmatpush1.msra.mxu0 0.0
  %1735 = vmatprep.subr.mxu0 0.0
  %1736 = vmatpush1.msra.mxu0 0.0
  %1737 = vmatprep.subr.mxu0 0.0
  %1738 = vmatpush1.msra.mxu0 0.0
  %1739 = vmatprep.subr.mxu0 0.0
  %1740 = vmatpush1.msra.mxu0 0.0
  %1741 = vmatprep.subr.mxu0 0.0
  %1742 = vmatpush1.msra.mxu0 0.0
  %1743 = vmatprep.subr.mxu0 0.0
  %1744 = vmatpush1.msra.mxu0 0.0
  %1745 = vmatprep.subr.mxu0 0.0
  %1746 = vmatpush1.msra.mxu0 0.0
  %1747 = vmatprep.subr.mxu0 0.0
  %1748 = vmatpush1.msra.mxu0 0.0
  %1749 = vmatprep.mubr.f32.mxu0 0.0
  %1750 = vmatmul.mubr.f32.gmra.mrb[0].mxu0 %v1668
  %v1751 = vpop.f32.mrb[0].mxu0
  %v1752 = vadd.f32 0.0, %v1751
  %v1753 = vpop.f32.mrb[0].mxu0
  %1754 = vdwg.mxu0
  %v1755 = vmul.f32 %v1752, 0.001953125
  %v1756 = vmul.f32 %v1755, %v1755
  %v1758 = vrot.slane %v1756, 7
  %v1760 = vsub.f32 %v1755, %v1758
  %v1761 = vld [vmem:[%s15] sm:$0x1]
  %v1762 = vadd.f32 %v1760, 1e-05
  %v1763 = vrsqrt.pop %v1762
  %v1766 = vunpack.c.l.s4 1966171168
  %v1767 = vunpack.c.0.s8 %v1766
  %v1768 = vlaneseq
  %v1769 = vshrl.u32 %v1768, 7
  %v1770 = vsub.s32 %v1767, %v1769
  %v1771 = vrot.slane %v1763, %v1770
  %v1772 = vcombine.high %v1771, %v1771
  %v1774 = vunpack.c.l.s4 1966171168
  %v1775 = vunpack.c.0.s8 %v1774
  %v1776 = vlaneseq
  %v1777 = vshrl.u32 %v1776, 7
  %v1778 = vsub.s32 %v1775, %v1777
  %v1779 = vrot.slane %v1772, %v1778
  %v1781 = vmul.f32 %v1761, %v1779
  %v1782 = vld [vmem:[%s16] sm:$0x1]
  %v1783 = vmul.f32 %v1755, %v1781
  %v1784 = vsub.f32 %v1782, %v1783
  %v1786 = vlaneseq
  %v1787 = vshrl.u32 %v1786, 7
  %v1788 = vsub.s32 0, %v1787
  %v1789 = vrot.slane %v1784, %v1788
  %v1791 = vsel %vm400, %v1781, %v1789
  %v1792 = vld [vmem:[%s2] sm:$0xff]
  %v1794 = vsel %vm526, %v1791, 0
  %1796 = vmatprep.subr.mxu0 0.0
  %1797 = vmatpush1.msra.mxu0 %v1792
  %1798 = vmatprep.subr.mxu0 0.0
  %1799 = vmatpush1.msra.mxu0 0.0
  %1800 = vmatprep.subr.mxu0 0.0
  %1801 = vmatpush1.msra.mxu0 0.0
  %1802 = vmatprep.subr.mxu0 0.0
  %1803 = vmatpush1.msra.mxu0 0.0
  %1804 = vmatprep.subr.mxu0 0.0
  %1805 = vmatpush1.msra.mxu0 0.0
  %1806 = vmatprep.subr.mxu0 0.0
  %1807 = vmatpush1.msra.mxu0 0.0
  %1808 = vmatprep.subr.mxu0 0.0
  %1809 = vmatpush1.msra.mxu0 0.0
  %1810 = vmatprep.subr.mxu0 0.0
  %1811 = vmatpush1.msra.mxu0 0.0
  %1812 = vmatprep.subr.mxu0 0.0
  %1813 = vmatpush1.msra.mxu0 0.0
  %1814 = vmatprep.subr.mxu0 0.0
  %1815 = vmatpush1.msra.mxu0 0.0
  %1816 = vmatprep.subr.mxu0 0.0
  %1817 = vmatpush1.msra.mxu0 0.0
  %1818 = vmatprep.subr.mxu0 0.0
  %1819 = vmatpush1.msra.mxu0 0.0
  %1820 = vmatprep.subr.mxu0 0.0
  %1821 = vmatpush1.msra.mxu0 0.0
  %1822 = vmatprep.subr.mxu0 0.0
  %1823 = vmatpush1.msra.mxu0 0.0
  %1824 = vmatprep.subr.mxu0 0.0
  %1825 = vmatpush1.msra.mxu0 0.0
  %1826 = vmatprep.subr.mxu0 0.0
  %1827 = vmatpush1.msra.mxu0 0.0
  %1828 = vmatprep.subr.mxu0 0.0
  %1829 = vmatpush1.msra.mxu0 0.0
  %1830 = vmatprep.subr.mxu0 0.0
  %1831 = vmatpush1.msra.mxu0 0.0
  %1832 = vmatprep.subr.mxu0 0.0
  %1833 = vmatpush1.msra.mxu0 0.0
  %1834 = vmatprep.subr.mxu0 0.0
  %1835 = vmatpush1.msra.mxu0 0.0
  %1836 = vmatprep.subr.mxu0 0.0
  %1837 = vmatpush1.msra.mxu0 0.0
  %1838 = vmatprep.subr.mxu0 0.0
  %1839 = vmatpush1.msra.mxu0 0.0
  %1840 = vmatprep.subr.mxu0 0.0
  %1841 = vmatpush1.msra.mxu0 0.0
  %1842 = vmatprep.subr.mxu0 0.0
  %1843 = vmatpush1.msra.mxu0 0.0
  %1844 = vmatprep.subr.mxu0 0.0
  %1845 = vmatpush1.msra.mxu0 0.0
  %1846 = vmatprep.subr.mxu0 0.0
  %1847 = vmatpush1.msra.mxu0 0.0
  %1848 = vmatprep.subr.mxu0 0.0
  %1849 = vmatpush1.msra.mxu0 0.0
  %1850 = vmatprep.subr.mxu0 0.0
  %1851 = vmatpush1.msra.mxu0 0.0
  %1852 = vmatprep.subr.mxu0 0.0
  %1853 = vmatpush1.msra.mxu0 0.0
  %1854 = vmatprep.subr.mxu0 0.0
  %1855 = vmatpush1.msra.mxu0 0.0
  %1856 = vmatprep.subr.mxu0 0.0
  %1857 = vmatpush1.msra.mxu0 0.0
  %1858 = vmatprep.subr.mxu0 0.0
  %1859 = vmatpush1.msra.mxu0 0.0
  %1860 = vmatprep.mubr.f32.mxu0 0.0
  %1861 = vmatmul.mubr.f32.gmra.mrb[0].mxu0 %v1794
  %v1862 = vpop.f32.mrb[0].mxu0
  %v1863 = vadd.f32 0.0, %v1862
  %v1864 = vpop.f32.mrb[0].mxu0
  %1865 = vdwg.mxu0
  %v1866 = vlaneseq
  %v1867 = vshrl.u32 %v1866, 7
  %v1868 = vsub.s32 0, %v1867
  %v1869 = vrot.slane %v1863, %v1868
  %v1870 = vmul.f32 %v1642, %v1869
  %v1871 = vmul.f32 %v1643, %v1869
  %v1872 = vmul.f32 %v1644, %v1869
  %v1873 = vmul.f32 %v1645, %v1869
  %v1874 = vlaneseq
  %v1875 = vshrl.u32 %v1874, 7
  %v1876 = vsub.s32 1, %v1875
  %v1877 = vrot.slane %v1863, %v1876
  %v1878 = vadd.f32 %v1870, %v1877
  %v1879 = vadd.f32 %v1871, %v1877
  %v1880 = vadd.f32 %v1872, %v1877
  %v1881 = vadd.f32 %v1873, %v1877
  %vm1882 = vcmp.ge.f32.partialorder %v1878, 0.0
  %vm1883 = vcmp.ge.f32.partialorder %v1879, 0.0
  %vm1884 = vcmp.ge.f32.partialorder %v1880, 0.0
  %vm1885 = vcmp.ge.f32.partialorder %v1881, 0.0
  %v1886 = vld [vmem:[%s17] sm:$0x1]
  %v1888 = vlaneseq
  %v1889 = vshrl.u32 %v1888, 7
  %v1890 = vsub.s32 0, %v1889
  %v1891 = vrot.slane %v1886, %v1890
  %v1893 = vmul.f32 %v1891, %v1878
  %v1894 = vmul.f32 %v1891, %v1879
  %v1895 = vmul.f32 %v1891, %v1880
  %v1896 = vmul.f32 %v1891, %v1881
  %v1897 = vsel %vm1882, %v1878, %v1893
  %v1898 = vsel %vm1883, %v1879, %v1894
  %v1899 = vsel %vm1884, %v1880, %v1895
  %v1900 = vsel %vm1885, %v1881, %v1896
  %1901 = vst [vmem:[%s18] sm:$0xff] %v1897
  %1902 = vst [vmem:[%s18 + $0x8] sm:$0xff] %v1898
  %1903 = vst [vmem:[%s18 + $0x10] sm:$0xff] %v1899
  %1904 = vst [vmem:[%s18 + $0x18] sm:$0xff] %v1900
  // Predicated region
  $region74: #{decoder_block_prelu.1} parent=0 // pred_check
    _
  $region75: #{decoder_block_prelu.1} parent=0 // pred_check_branch
    %1906 = sbr.rel (0) target = $region77
  $region76: #{decoder_block_prelu.1} parent=0 // pred_region
    _
  $region77: #{decoder_block_prelu.1} parent=0 // pred_fallthru
    _
  // Predicated region
  $region78: #{decoder_block_prelu.1} parent=0 // pred_check
    _
  $region79: #{decoder_block_prelu.1} parent=0 // pred_check_branch
    %1908 = sbr.rel (0) target = $region81
  $region80: #{decoder_block_prelu.1} parent=0 // pred_region
    _
  $region81: #{decoder_block_prelu.1} parent=0 // pred_fallthru
    _

</llo_original>
